<compile_context>
chip_gen: v5e
topology: v5e:2x2
jax: 0.10.0
libtpu: 0.0.40
codegen_flags: <defaults>
</compile_context>

<pallas_src>
import jax
import jax.numpy as jnp
from jax.experimental import pallas as pl
from jax.experimental.pallas import tpu as pltpu


def _round_up(n, m):
    return ((n + m - 1) // m) * m


def _pad_to(a, shape):
    pads = [(0, s - d) for d, s in zip(a.shape, shape)]
    return jnp.pad(a, pads)


def _mlp_kernel(x_ref, w1_ref, b1_ref, w2_ref, b2_ref, o_ref, acc_ref):
    # Grid: (batch tiles [parallel], K tiles over f_in [arbitrary/reduction]).
    # x_ref : (tb, tk)        bf16      w1_ref: (tk, Hid)   bf16  (pre-transposed (in,out))
    # b1_ref: (1, Hid)        f32       w2_ref: (Hid, Nout) bf16  (pre-transposed (in,out))
    # b2_ref: (1, Nout)       f32       o_ref : (tb, Nout)  f32
    # acc_ref: (tb, Hid) f32 VMEM accumulator, resident across the K axis.
    k = pl.program_id(1)

    @pl.when(k == 0)
    def _():
        acc_ref[...] = jnp.zeros_like(acc_ref)

    # Backbone partial product: bf16 x bf16 on MXU, f32 accumulate.
    acc_ref[...] += jnp.dot(x_ref[...], w1_ref[...],
                            preferred_element_type=jnp.float32)

    @pl.when(k == pl.num_programs(1) - 1)
    def _():
        # Finalize backbone (bias) then run the tiny classifier in bf16.
        h = (acc_ref[...] + b1_ref[...]).astype(jnp.bfloat16)
        out = jnp.dot(h, w2_ref[...],
                      preferred_element_type=jnp.float32) + b2_ref[...]
        o_ref[...] = out.astype(o_ref.dtype)


def pack_params(w_net, b_net, w_cls, b_cls):
    """One-time weight packing (call at model init, NOT per forward).

    Pads, transposes to (in, out) layout, and casts weights to bf16 so the
    per-call path never touches the f32 PyTorch-layout weights again.
    """
    hid, f_in = w_net.shape            # PyTorch (out, in): (1000, C*H*W)
    n_out = w_cls.shape[0]             # 10

    f_in_p = _round_up(f_in, 128)
    hid_p = _round_up(hid, 128)        # 1000 -> 1024
    n_out_p = _round_up(n_out, 16)     # 10   -> 16 (small pad; weight DMA is the lever)
    # Reduction tile over f_in: largest of {512,256,128} dividing f_in_p.
    tk = next(t for t in (512, 256, 128) if f_in_p % t == 0)

    w1_t = _pad_to(w_net.T, (f_in_p, hid_p)).astype(jnp.bfloat16)    # (in, out)
    b1 = _pad_to(b_net.reshape(1, -1), (1, hid_p)).astype(jnp.float32)
    w2_t = _pad_to(w_cls.T, (hid_p, n_out_p)).astype(jnp.bfloat16)   # (in, out)
    b2 = _pad_to(b_cls.reshape(1, -1), (1, n_out_p)).astype(jnp.float32)

    return dict(w1_t=w1_t, b1=b1, w2_t=w2_t, b2=b2,
                f_in=f_in, n_out=n_out, tk=tk)


def model_forward(x_nchw, packed):
    """x_nchw: (B, C, H, W) f32.  `packed`: output of pack_params (init-time)."""
    w1_t, b1_p = packed["w1_t"], packed["b1"]
    w2_t, b2_p = packed["w2_t"], packed["b2"]
    f_in, n_out, tk = packed["f_in"], packed["n_out"], packed["tk"]
    f_in_p, hid_p = w1_t.shape
    n_out_p = w2_t.shape[1]

    B = x_nchw.shape[0]
    x2d = x_nchw.reshape(B, -1)                    # glue: flatten (plain JAX)
    assert x2d.shape[1] == f_in, "backbone input feature mismatch"

    # Batch padding / tiling: sublane-aligned, parallel grid axis for megacore.
    if B <= 128:
        B_p = _round_up(B, 8)
        tb = B_p
    else:
        B_p = _round_up(B, 128)
        tb = 128

    x_p = _pad_to(x2d, (B_p, f_in_p)).astype(jnp.bfloat16)

    grid = (B_p // tb, f_in_p // tk)

    flops = 2 * B_p * (hid_p * f_in_p + n_out_p * hid_p)
    bytes_accessed = (
        x_p.size * 2 + w1_t.size * 2 + b1_p.size * 4
        + w2_t.size * 2 + b2_p.size * 4 + B_p * n_out_p * 4
    )

    out_p = pl.pallas_call(
        _mlp_kernel,
        out_shape=jax.ShapeDtypeStruct((B_p, n_out_p), jnp.float32),
        grid_spec=pltpu.PrefetchScalarGridSpec(
            num_scalar_prefetch=0,
            grid=grid,
            in_specs=[
                pl.BlockSpec((tb, tk), lambda b, k: (b, k)),          # x tile
                pl.BlockSpec((tk, hid_p), lambda b, k: (k, 0)),       # w1 K-slab
                pl.BlockSpec((1, hid_p), lambda b, k: (0, 0)),        # b1 (invariant)
                pl.BlockSpec((hid_p, n_out_p), lambda b, k: (0, 0)),  # w2 (invariant)
                pl.BlockSpec((1, n_out_p), lambda b, k: (0, 0)),      # b2 (invariant)
            ],
            out_specs=pl.BlockSpec((tb, n_out_p), lambda b, k: (b, 0)),
            scratch_shapes=[pltpu.VMEM((tb, hid_p), jnp.float32)],
        ),
        compiler_params=pltpu.CompilerParams(
            dimension_semantics=("parallel", "arbitrary"),
            vmem_limit_bytes=24 << 20,
        ),
        cost_estimate=pl.CostEstimate(
            flops=flops, transcendentals=0, bytes_accessed=bytes_accessed
        ),
    )(x_p, w1_t, b1_p, w2_t, b2_p)

    return out_p[:B, :n_out]                        # glue: drop padding


def _init_linear(key, out_features, in_features):
    # PyTorch nn.Linear default init: U(-1/sqrt(in), 1/sqrt(in)) for W and b.
    kw, kb = jax.random.split(key)
    bound = 1.0 / jnp.sqrt(jnp.float32(in_features))
    w = jax.random.uniform(kw, (out_features, in_features), jnp.float32, -bound, bound)
    b = jax.random.uniform(kb, (out_features,), jnp.float32, -bound, bound)
    return w, b


if __name__ == "__main__":
    key = jax.random.PRNGKey(0)
    k_x, k_net, k_cls = jax.random.split(key, 3)

    # Small deterministic NCHW input.
    B, C, H, W = 2, 4, 16, 16
    x = jax.random.normal(k_x, (B, C, H, W), jnp.float32)

    # "net" backbone: Linear(C*H*W -> 1000); classifier: Linear(1000 -> 10).
    w_net, b_net = _init_linear(k_net, 1000, C * H * W)
    w_cls, b_cls = _init_linear(k_cls, 10, 1000)

    # One-time weight packing (would live in model __init__ in real code).
    packed = pack_params(w_net, b_net, w_cls, b_cls)
    packed = jax.tree_util.tree_map(
        lambda a: jax.block_until_ready(a) if isinstance(a, jax.Array) else a, packed)

    out = model_forward(x, packed)
    out = jax.block_until_ready(out)

    # Reference with the same bf16 quantization of both layers (f32 math),
    # matching PyTorch Linear semantics otherwise.
    x2d = x.reshape(B, -1)
    x_bf = x2d.astype(jnp.bfloat16).astype(jnp.float32)
    w1_bf = w_net.astype(jnp.bfloat16).astype(jnp.float32)
    h_ref = x_bf @ w1_bf.T + b_net
    h_bf = h_ref.astype(jnp.bfloat16).astype(jnp.float32)
    w2_bf = w_cls.astype(jnp.bfloat16).astype(jnp.float32)
    ref = h_bf @ w2_bf.T + b_cls

    assert out.shape == (B, 10)
    assert jnp.allclose(out, ref, atol=3e-2, rtol=3e-2)

    print("KERNEL_OK")
</pallas_src>

<mosaic_0001>
module attributes {stable_mosaic.version = 11 : i64} {
  func.func @_mlp_kernel(%arg0: i32, %arg1: i32, %arg2: memref<8x512xbf16, #tpu.memory_space<vmem>>, %arg3: memref<512x1024xbf16, #tpu.memory_space<vmem>>, %arg4: memref<1x1024xf32, #tpu.memory_space<vmem>>, %arg5: memref<1024x16xbf16, #tpu.memory_space<vmem>>, %arg6: memref<1x16xf32, #tpu.memory_space<vmem>>, %arg7: memref<8x16xf32, #tpu.memory_space<vmem>>, %arg8: memref<8x1024xf32, #tpu.memory_space<vmem>>) attributes {dimension_semantics = [#tpu.dimension_semantics<parallel>, #tpu.dimension_semantics<arbitrary>], iteration_bounds = array<i64: 1, 2>, scalar_prefetch = 0 : i64, scratch_operands = 1 : i64, tpu.core_type = #tpu.core_type<tc>, window_params = [{transform_indices = @transform_0, window_bounds = array<i64: 8, 512>}, {transform_indices = @transform_1, window_bounds = array<i64: 512, 1024>}, {pipeline_mode = #tpu.pipeline_mode<synchronous>, transform_indices = @transform_2, window_bounds = array<i64: 1, 1024>}, {pipeline_mode = #tpu.pipeline_mode<synchronous>, transform_indices = @transform_3, window_bounds = array<i64: 1024, 16>}, {pipeline_mode = #tpu.pipeline_mode<synchronous>, transform_indices = @transform_4, window_bounds = array<i64: 1, 16>}, {transform_indices = @transform_5, window_bounds = array<i64: 8, 16>}]} {
    %c0_i32 = arith.constant 0 : i32
    %0 = arith.cmpi eq, %arg1, %c0_i32 : i32
    %1 = arith.extui %0 : i1 to i32
    %c0_i32_0 = arith.constant 0 : i32
    %2 = arith.cmpi ne, %1, %c0_i32_0 : i32
    scf.if %2 {
      %cst_9 = arith.constant 0.000000e+00 : f32
      %12 = vector.broadcast %cst_9 : f32 to vector<8x1024xf32>
      %c0_10 = arith.constant 0 : index
      %c0_11 = arith.constant 0 : index
      %13 = vector.load %arg8[%c0_10, %c0_11] : memref<8x1024xf32, #tpu.memory_space<vmem>>, vector<8x1024xf32>
      tpu.vector_store %arg8[%c0_10, %c0_11], %12 {strides = array<i32>} : memref<8x1024xf32, #tpu.memory_space<vmem>>, vector<8x1024xf32>,
    } else {
    }
    %c0 = arith.constant 0 : index
    %c0_1 = arith.constant 0 : index
    %3 = vector.load %arg8[%c0, %c0_1] : memref<8x1024xf32, #tpu.memory_space<vmem>>, vector<8x1024xf32>
    %c0_2 = arith.constant 0 : index
    %c0_3 = arith.constant 0 : index
    %4 = vector.load %arg2[%c0_2, %c0_3] : memref<8x512xbf16, #tpu.memory_space<vmem>>, vector<8x512xbf16>
    %c0_4 = arith.constant 0 : index
    %c0_5 = arith.constant 0 : index
    %5 = vector.load %arg3[%c0_4, %c0_5] : memref<512x1024xbf16, #tpu.memory_space<vmem>>, vector<512x1024xbf16>
    %cst = arith.constant dense<0.000000e+00> : vector<8x1024xf32>
    %6 = tpu.matmul %4, %5, %cst {dimension_numbers = #tpu.dot_dimension_numbers<[1], [0], [0], [1], [0, 0, 1, 1], [], []>} : vector<8x512xbf16>, vector<512x1024xbf16>, vector<8x1024xf32> -> vector<8x1024xf32>
    %7 = arith.addf %3, %6 : vector<8x1024xf32>
    %c0_6 = arith.constant 0 : index
    %c0_7 = arith.constant 0 : index
    %8 = vector.load %arg8[%c0_6, %c0_7] : memref<8x1024xf32, #tpu.memory_space<vmem>>, vector<8x1024xf32>
    tpu.vector_store %arg8[%c0_6, %c0_7], %7 {strides = array<i32>} : memref<8x1024xf32, #tpu.memory_space<vmem>>, vector<8x1024xf32>,
    %c1_i32 = arith.constant 1 : i32
    %9 = arith.cmpi eq, %arg1, %c1_i32 : i32
    %10 = arith.extui %9 : i1 to i32
    %c0_i32_8 = arith.constant 0 : i32
    %11 = arith.cmpi ne, %10, %c0_i32_8 : i32
    scf.if %11 {
      %c0_9 = arith.constant 0 : index
      %c0_10 = arith.constant 0 : index
      %12 = vector.load %arg8[%c0_9, %c0_10] : memref<8x1024xf32, #tpu.memory_space<vmem>>, vector<8x1024xf32>
      %c0_11 = arith.constant 0 : index
      %c0_12 = arith.constant 0 : index
      %13 = vector.load %arg4[%c0_11, %c0_12] : memref<1x1024xf32, #tpu.memory_space<vmem>>, vector<1x1024xf32>
      %14 = vector.broadcast %13 : vector<1x1024xf32> to vector<8x1024xf32>
      %15 = arith.addf %12, %14 : vector<8x1024xf32>
      %16 = arith.truncf %15 : vector<8x1024xf32> to vector<8x1024xbf16>
      %c0_13 = arith.constant 0 : index
      %c0_14 = arith.constant 0 : index
      %17 = vector.load %arg5[%c0_13, %c0_14] : memref<1024x16xbf16, #tpu.memory_space<vmem>>, vector<1024x16xbf16>
      %cst_15 = arith.constant dense<0.000000e+00> : vector<8x16xf32>
      %18 = tpu.matmul %16, %17, %cst_15 {dimension_numbers = #tpu.dot_dimension_numbers<[1], [0], [0], [1], [0, 0, 1, 1], [], []>} : vector<8x1024xbf16>, vector<1024x16xbf16>, vector<8x16xf32> -> vector<8x16xf32>
      %c0_16 = arith.constant 0 : index
      %c0_17 = arith.constant 0 : index
      %19 = vector.load %arg6[%c0_16, %c0_17] : memref<1x16xf32, #tpu.memory_space<vmem>>, vector<1x16xf32>
      %20 = vector.broadcast %19 : vector<1x16xf32> to vector<8x16xf32>
      %21 = arith.addf %18, %20 : vector<8x16xf32>
      %c0_18 = arith.constant 0 : index
      %c0_19 = arith.constant 0 : index
      %22 = vector.load %arg7[%c0_18, %c0_19] : memref<8x16xf32, #tpu.memory_space<vmem>>, vector<8x16xf32>
      tpu.vector_store %arg7[%c0_18, %c0_19], %21 {strides = array<i32>} : memref<8x16xf32, #tpu.memory_space<vmem>>, vector<8x16xf32>,
    } else {
    }
    return
  }
  func.func @transform_0(%arg0: i32, %arg1: i32) -> (i32, i32) {
    %c0_i32 = arith.constant 0 : i32
    return %arg0, %arg1 : i32, i32
  }
  func.func @transform_1(%arg0: i32, %arg1: i32) -> (i32, i32) {
    %c0_i32 = arith.constant 0 : i32
    %c0_i32_0 = arith.constant 0 : i32
    return %arg1, %c0_i32 : i32, i32
  }
  func.func @transform_2(%arg0: i32, %arg1: i32) -> (i32, i32) {
    %c0_i32 = arith.constant 0 : i32
    %c0_i32_0 = arith.constant 0 : i32
    %c0_i32_1 = arith.constant 0 : i32
    return %c0_i32, %c0_i32_0 : i32, i32
  }
  func.func @transform_3(%arg0: i32, %arg1: i32) -> (i32, i32) {
    %c0_i32 = arith.constant 0 : i32
    %c0_i32_0 = arith.constant 0 : i32
    %c0_i32_1 = arith.constant 0 : i32
    return %c0_i32, %c0_i32_0 : i32, i32
  }
  func.func @transform_4(%arg0: i32, %arg1: i32) -> (i32, i32) {
    %c0_i32 = arith.constant 0 : i32
    %c0_i32_0 = arith.constant 0 : i32
    %c0_i32_1 = arith.constant 0 : i32
    return %c0_i32, %c0_i32_0 : i32, i32
  }
  func.func @transform_5(%arg0: i32, %arg1: i32) -> (i32, i32) {
    %c0_i32 = arith.constant 0 : i32
    %c0_i32_0 = arith.constant 0 : i32
    return %arg0, %c0_i32 : i32, i32
  }
}

</mosaic_0001>

<llo_original>
// kernel: tpu_custom_call.1
$region0: #{tpu_custom_call.1}
  #allocation0 [shape = 'u32[]', space=smem, size = 0x4, offset = 0x4, fixed_abs, tag = 'smem constant byte address 0x4 - core index']
  #allocation1 [shape = 'u32[72,128]{1,0:T(1,128)}', space=vmem, size = 0x9000, scoped, tag = 'internal scratch']
  #allocation2 [shape = 'f32[8,1024]{1,0:T(8,128)}', space=vmem, size = 0x8000, scoped, tag = 'scratch operand']
  %s0 = inlined_call_operand.hbm [shape: bf16[8,1024], index: 0, kind: input, shape index: {}]
  %s1 = inlined_call_operand.hbm [shape: bf16[1024,1024], index: 1, kind: input, shape index: {}]
  %s2 = inlined_call_operand.hbm [shape: f32[1,1024], index: 2, kind: input, shape index: {}]
  %s3 = inlined_call_operand.vmem [shape: bf16[1024,16], index: 3, kind: input, shape index: {}]
  %s4 = inlined_call_operand.hbm [shape: f32[1,16], index: 4, kind: input, shape index: {}]
  %s5 = inlined_call_operand.hbm [shape: f32[8,16], index: 5, kind: output, shape index: {}]
  %s6 = sld [smem:[#allocation0]]
  $region77: #{tpu_custom_call.1} parent=0
    _
  %s8 = ssub.s32 1, %s6
  %s9 = scalar_select 0, %s8, %s6
  $region1: #{tpu_custom_call.1} parent=0
    #allocation3 [shape = 'u8[16384]{0}', space=vmem, size = 0x4000, scoped, tag = 'input window, operand 0']
    #allocation4 [shape = 's32[2]{0}', space=sflag, size = 0x8, scoped, tag = 'scoped memory for tpu_custom_call.1']
    #allocation5 [shape = 's32[2]{0}', space=sflag, size = 0x8, scoped, tag = 'scoped memory for tpu_custom_call.1']
    #allocation6 [shape = 'u8[2097152]{0}', space=vmem, size = 0x200000, scoped, tag = 'input window, operand 1']
    #allocation7 [shape = 's32[2]{0}', space=sflag, size = 0x8, scoped, tag = 'scoped memory for tpu_custom_call.1']
    #allocation8 [shape = 'u8[4096]{0}', space=vmem, size = 0x1000, scoped, tag = 'input window, operand 2, single buffered']
    #allocation9 [shape = 'u8[512]{0}', space=vmem, size = 0x400, scoped, tag = 'input window, operand 4, single buffered']
    #allocation10 [shape = 's32[1]{0}', space=sflag, size = 0x4, scoped, tag = 'scoped memory for tpu_custom_call.1']
    #allocation11 [shape = 'u8[4096]{0}', space=vmem, size = 0x1000, scoped, tag = 'output window, operand 0, single buffered']
    %10 = vsyncpa [#allocation4], 0
    %s11 = scalar_lea.sflag [#allocation4], 1
    %12 = vsyncpa %s11, 0
    %13 = vsyncpa [#allocation7], 0
    %s14 = scalar_lea.sflag [#allocation7], 1
    %15 = vsyncpa %s14, 0
    %16 = vsyncpa [#allocation10], 0
    %17 = vsyncpa [#allocation5], 0
    loop: start=0, step=1, limit=4
    $region2: #{tpu_custom_call.1} parent=1 // loop_pre_header
      _
    $region3: #{tpu_custom_call.1} parent=1 // loop_header
      %s19 = sphi 0, %s23
      %p20 = scmp.ge.s32.totalorder %s19, 4
      %s26 = sphi 0, %s38
      %s27 = sphi 0, %s34
      %s28 = sphi 0, %s26
      %s29 = sphi 0, %s27
      %s30 = sphi 0, %s28
      %s31 = sphi 0, %s29
      %s43 = sphi 0, %s45
      %s46 = sphi 0, %s43
      %s47 = sphi 0, %s46
      %s63 = sphi 0, %s47
      %s69 = sphi 0, %s71
      %s72 = sphi 0, %s69
      %s73 = sphi 0, %s72
      %s89 = sphi 0, %s73
      %s93 = sphi 0, %s93
      %s95 = sphi 0, %s93
      %s96 = sphi 0, %s95
      %s110 = sphi 0, %s96
      %s114 = sphi 0, %s114
      %s116 = sphi 0, %s114
      %s117 = sphi 0, %s116
      %s131 = sphi 0, %s117
      %s135 = sphi 0, %s135
      %s137 = sphi 0, %s135
      %s138 = sphi 0, %s137
      %s152 = sphi 0, %s138
      %s158 = sphi 0, %s160
      %s161 = sphi 0, %s158
      %s162 = sphi 0, %s161
      %s178 = sphi 0, %s162
    $region4: #{tpu_custom_call.1} parent=1 // loop_header_branch
      %22 = sbr.rel (%p20) target = $region8
    $region5: #{tpu_custom_call.1} parent=1 // loop_body
      %s24 = ssub.s32 %s19, 1
      %s25 = ssub.s32 %s19, 2
      %s32 = sadd.s32 1, %s27
      %p33 = scmp.ge.s32.totalorder %s32, 2
      %s34 = scalar_select %p33, 0, %s32
      %s35 = sadd.s32 1, %s26
      %s36 = scalar_select %p33, %s35, %s26
      %p37 = scmp.ge.s32.totalorder %s36, 1
      %s38 = scalar_select %p37, 0, %s36
      %s39 = ssub.s32 %s26, %s38
      %s40 = ssub.s32 %s27, %s34
      %s41 = sor.u32 %s39, %s40
      %p42 = scmp.eq.s32.totalorder %s41, 0
      %s44 = sadd.s32 %s43, 1
      %s45 = scalar_select %p42, %s43, %s44
      %p48 = pneg %p42
      %p49 = scmp.eq.s32.totalorder %s19, 1
      %p50 = por %p48, %p49
      %p51 = scmp.ne.s32.totalorder %s43, %s46
      %p52 = scmp.eq.s32.totalorder %s19, 0
      %p53 = por %p51, %p52
      %p54 = scmp.ne.s32.totalorder %s43, %s46
      %p55 = scmp.eq.s32.totalorder %s24, 1
      %p56 = por %p54, %p55
      %p57 = scmp.ne.s32.totalorder %s46, %s47
      %p58 = scmp.eq.s32.totalorder %s24, 0
      %p59 = por %p57, %p58
      %p60 = scmp.ne.s32.totalorder %s46, %s47
      %p61 = scmp.eq.s32.totalorder %s25, 1
      %p62 = por %p60, %p61
      %p64 = scmp.ne.s32.totalorder %s47, %s63
      %p65 = scmp.eq.s32.totalorder %s25, 0
      %p66 = por %p64, %p65
      %s67 = ssub.s32 %s27, %s34
      %p68 = scmp.eq.s32.totalorder %s67, 0
      %s70 = sadd.s32 %s69, 1
      %s71 = scalar_select %p68, %s69, %s70
      %p74 = pneg %p68
      %p75 = scmp.eq.s32.totalorder %s19, 1
      %p76 = por %p74, %p75
      %p77 = scmp.ne.s32.totalorder %s69, %s72
      %p78 = scmp.eq.s32.totalorder %s19, 0
      %p79 = por %p77, %p78
      %p80 = scmp.ne.s32.totalorder %s69, %s72
      %p81 = scmp.eq.s32.totalorder %s24, 1
      %p82 = por %p80, %p81
      %p83 = scmp.ne.s32.totalorder %s72, %s73
      %p84 = scmp.eq.s32.totalorder %s24, 0
      %p85 = por %p83, %p84
      %p86 = scmp.ne.s32.totalorder %s72, %s73
      %p87 = scmp.eq.s32.totalorder %s25, 1
      %p88 = por %p86, %p87
      %p90 = scmp.ne.s32.totalorder %s73, %s89
      %p91 = scmp.eq.s32.totalorder %s25, 0
      %p92 = por %p90, %p91
      %s94 = sadd.s32 %s93, 1
      %p97 = scmp.eq.s32.totalorder %s19, 1
      %p98 = scmp.ne.s32.totalorder %s93, %s95
      %p99 = scmp.eq.s32.totalorder %s19, 0
      %p100 = por %p98, %p99
      %p101 = scmp.ne.s32.totalorder %s93, %s95
      %p102 = scmp.eq.s32.totalorder %s24, 1
      %p103 = por %p101, %p102
      %p104 = scmp.ne.s32.totalorder %s95, %s96
      %p105 = scmp.eq.s32.totalorder %s24, 0
      %p106 = por %p104, %p105
      %p107 = scmp.ne.s32.totalorder %s95, %s96
      %p108 = scmp.eq.s32.totalorder %s25, 1
      %p109 = por %p107, %p108
      %p111 = scmp.ne.s32.totalorder %s96, %s110
      %p112 = scmp.eq.s32.totalorder %s25, 0
      %p113 = por %p111, %p112
      %s115 = sadd.s32 %s114, 1
      %p118 = scmp.eq.s32.totalorder %s19, 1
      %p119 = scmp.ne.s32.totalorder %s114, %s116
      %p120 = scmp.eq.s32.totalorder %s19, 0
      %p121 = por %p119, %p120
      %p122 = scmp.ne.s32.totalorder %s114, %s116
      %p123 = scmp.eq.s32.totalorder %s24, 1
      %p124 = por %p122, %p123
      %p125 = scmp.ne.s32.totalorder %s116, %s117
      %p126 = scmp.eq.s32.totalorder %s24, 0
      %p127 = por %p125, %p126
      %p128 = scmp.ne.s32.totalorder %s116, %s117
      %p129 = scmp.eq.s32.totalorder %s25, 1
      %p130 = por %p128, %p129
      %p132 = scmp.ne.s32.totalorder %s117, %s131
      %p133 = scmp.eq.s32.totalorder %s25, 0
      %p134 = por %p132, %p133
      %s136 = sadd.s32 %s135, 1
      %p139 = scmp.eq.s32.totalorder %s19, 1
      %p140 = scmp.ne.s32.totalorder %s135, %s137
      %p141 = scmp.eq.s32.totalorder %s19, 0
      %p142 = por %p140, %p141
      %p143 = scmp.ne.s32.totalorder %s135, %s137
      %p144 = scmp.eq.s32.totalorder %s24, 1
      %p145 = por %p143, %p144
      %p146 = scmp.ne.s32.totalorder %s137, %s138
      %p147 = scmp.eq.s32.totalorder %s24, 0
      %p148 = por %p146, %p147
      %p149 = scmp.ne.s32.totalorder %s137, %s138
      %p150 = scmp.eq.s32.totalorder %s25, 1
      %p151 = por %p149, %p150
      %p153 = scmp.ne.s32.totalorder %s138, %s152
      %p154 = scmp.eq.s32.totalorder %s25, 0
      %p155 = por %p153, %p154
      %s156 = ssub.s32 %s26, %s38
      %p157 = scmp.eq.s32.totalorder %s156, 0
      %s159 = sadd.s32 %s158, 1
      %s160 = scalar_select %p157, %s158, %s159
      %p163 = pneg %p157
      %p164 = scmp.eq.s32.totalorder %s19, 1
      %p165 = por %p163, %p164
      %p166 = scmp.ne.s32.totalorder %s158, %s161
      %p167 = scmp.eq.s32.totalorder %s19, 0
      %p168 = por %p166, %p167
      %p169 = scmp.ne.s32.totalorder %s158, %s161
      %p170 = scmp.eq.s32.totalorder %s24, 1
      %p171 = por %p169, %p170
      %p172 = scmp.ne.s32.totalorder %s161, %s162
      %p173 = scmp.eq.s32.totalorder %s24, 0
      %p174 = por %p172, %p173
      %p175 = scmp.ne.s32.totalorder %s161, %s162
      %p176 = scmp.eq.s32.totalorder %s25, 1
      %p177 = por %p175, %p176
      %p179 = scmp.ne.s32.totalorder %s162, %s178
      %p180 = scmp.eq.s32.totalorder %s25, 0
      %p181 = por %p179, %p180
      %p182 = scmp.le.s32.totalorder 1, %s19
      %p183 = scmp.lt.s32.totalorder %s19, 3
      %p184 = pnand %p182, %p183
      %p185 = pneg %p184
      // Predicated region
      $region9: #{tpu_custom_call.1} parent=5 // pred_check
        _
      $region10: #{tpu_custom_call.1} parent=5 // pred_check_branch
        %187 = sbr.rel (%p184) target = $region12
      $region11: #{tpu_custom_call.1} parent=5 // pred_region
        %s188 = ssub.s32 %s19, 1
        // Predicated region
        $region13: #{tpu_custom_call.1} parent=11 // pred_check
          %p189 = pneg %p106
        $region14: #{tpu_custom_call.1} parent=11 // pred_check_branch
          %191 = sbr.rel (%p189) target = $region16
        $region15: #{tpu_custom_call.1} parent=11 // pred_region
          %193 = vsyncadd [#allocation7], 0
          %s195 = sshll.u32 %s2, 4
          %s196 = int_to_ptr.hbm [resolvable:$true] %s195
          %s197 = sshll.u32 [#allocation8], 4
          %s198 = int_to_ptr.vmem [resolvable:$true] %s197
          %200 = dma.hbm_to_vmem [thread:$0]  %s196, 128, %s198, [#allocation7]
        $region16: #{tpu_custom_call.1} parent=11 // pred_fallthru
          _
        // Predicated region
        $region17: #{tpu_custom_call.1} parent=11 // pred_check
          %p201 = pneg %p127
        $region18: #{tpu_custom_call.1} parent=11 // pred_check_branch
          %203 = sbr.rel (%p201) target = $region20
        $region19: #{tpu_custom_call.1} parent=11 // pred_region
          _
        $region20: #{tpu_custom_call.1} parent=11 // pred_fallthru
          _
        // Predicated region
        $region21: #{tpu_custom_call.1} parent=11 // pred_check
          %p204 = pneg %p148
        $region22: #{tpu_custom_call.1} parent=11 // pred_check_branch
          %206 = sbr.rel (%p204) target = $region24
        $region23: #{tpu_custom_call.1} parent=11 // pred_region
          %208 = vsyncadd [#allocation10], 0
          %s210 = sshll.u32 %s4, 4
          %s211 = int_to_ptr.hbm [resolvable:$true] %s210
          %s212 = sshll.u32 [#allocation9], 4
          %s213 = int_to_ptr.vmem [resolvable:$true] %s212
          %215 = dma.hbm_to_vmem [thread:$0]  %s211, 16, %s213, [#allocation10]
        $region24: #{tpu_custom_call.1} parent=11 // pred_fallthru
          _
      $region12: #{tpu_custom_call.1} parent=5 // pred_fallthru
        _
      %p216 = scmp.lt.s32.totalorder %s19, 2
      // Predicated region
      $region25: #{tpu_custom_call.1} parent=5 // pred_check
        %p217 = pneg %p216
      $region26: #{tpu_custom_call.1} parent=5 // pred_check_branch
        %219 = sbr.rel (%p217) target = $region28
      $region27: #{tpu_custom_call.1} parent=5 // pred_region
        // Predicated region
        $region29: #{tpu_custom_call.1} parent=27 // pred_check
          %p220 = pneg %p53
        $region30: #{tpu_custom_call.1} parent=27 // pred_check_branch
          %222 = sbr.rel (%p220) target = $region32
        $region31: #{tpu_custom_call.1} parent=27 // pred_region
          %s223 = sand.u32 %s43, 1
          %s224 = scalar_lea.sflag [#allocation4], %s223
          %s225 = sand.u32 %s43, 1
          %s226 = smul.addr %s225, 16
          %s227 = scalar_lea.vmem [#allocation3], %s226
          %s228 = smul.u32 4, %s27
          %230 = vsyncadd %s224, 0
          %s231 = smul.addr %s26, 8
          %s232 = sadd.s32 %s228, %s231
          %s233 = smul.addr %s232, 4
          %s234 = scalar_lea.hbm %s0, %s233
          %s236 = sshll.u32 %s234, 4
          %s237 = int_to_ptr.hbm [resolvable:$true] %s236
          %s238 = sshll.u32 %s227, 4
          %s239 = int_to_ptr.vmem [resolvable:$true] %s238
          %241 = dma.hbm_to_vmem [thread:$0]  %s237, 256, %s239, %s224
        $region32: #{tpu_custom_call.1} parent=27 // pred_fallthru
          _
        // Predicated region
        $region33: #{tpu_custom_call.1} parent=27 // pred_check
          %p242 = pneg %p79
        $region34: #{tpu_custom_call.1} parent=27 // pred_check_branch
          %244 = sbr.rel (%p242) target = $region36
        $region35: #{tpu_custom_call.1} parent=27 // pred_region
          %s245 = sand.u32 %s19, 1
          %s246 = scalar_lea.sflag [#allocation7], %s245
          %s247 = sand.u32 %s69, 1
          %s248 = smul.addr %s247, 2048
          %s249 = scalar_lea.vmem [#allocation6], %s248
          %s250 = smul.u32 64, %s27
          %252 = vsyncadd %s246, 0
          %s253 = smul.addr %s250, 8
          %s254 = smul.addr %s253, 4
          %s255 = scalar_lea.hbm %s1, %s254
          %s256 = sshll.u32 %s255, 4
          %s257 = int_to_ptr.hbm [resolvable:$true] %s256
          %s258 = sshll.u32 %s249, 4
          %s259 = int_to_ptr.vmem [resolvable:$true] %s258
          %264 = dma.hbm_to_vmem [thread:$0]  %s257, 32768, %s259, %s246, 512, 512, 32
        $region36: #{tpu_custom_call.1} parent=27 // pred_fallthru
          _
      $region28: #{tpu_custom_call.1} parent=5 // pred_fallthru
        _
      %p265 = scmp.le.s32.totalorder 1, %s19
      %p266 = scmp.lt.s32.totalorder %s19, 3
      %p267 = pnand %p265, %p266
      %p268 = pneg %p267
      // Predicated region
      $region37: #{tpu_custom_call.1} parent=5 // pred_check
        _
      $region38: #{tpu_custom_call.1} parent=5 // pred_check_branch
        %270 = sbr.rel (%p267) target = $region40
      $region39: #{tpu_custom_call.1} parent=5 // pred_region
        %s271 = ssub.s32 %s19, 1
        %s272 = sand.u32 %s46, 1
        %s273 = scalar_lea.sflag [#allocation4], %s272
        %s274 = sand.u32 %s46, 1
        %s275 = smul.addr %s274, 16
        %s276 = scalar_lea.vmem [#allocation3], %s275
        // Predicated region
        $region41: #{tpu_custom_call.1} parent=39 // pred_check
          %p277 = pneg %p59
        $region42: #{tpu_custom_call.1} parent=39 // pred_check_branch
          %279 = sbr.rel (%p277) target = $region44
        $region43: #{tpu_custom_call.1} parent=39 // pred_region
          %281 = dma.done %s273, 256
        $region44: #{tpu_custom_call.1} parent=39 // pred_fallthru
          _
        %s282 = sand.u32 %s24, 1
        %s283 = scalar_lea.sflag [#allocation7], %s282
        %s284 = sand.u32 %s72, 1
        %s285 = smul.addr %s284, 2048
        %s286 = scalar_lea.vmem [#allocation6], %s285
        // Predicated region
        $region45: #{tpu_custom_call.1} parent=39 // pred_check
          %p287 = pneg %p85
        $region46: #{tpu_custom_call.1} parent=39 // pred_check_branch
          %289 = sbr.rel (%p287) target = $region48
        $region47: #{tpu_custom_call.1} parent=39 // pred_region
          %291 = dma.done %s283, 32768
        $region48: #{tpu_custom_call.1} parent=39 // pred_fallthru
          _
        // Predicated region
        $region49: #{tpu_custom_call.1} parent=39 // pred_check
          %p292 = pneg %p106
        $region50: #{tpu_custom_call.1} parent=39 // pred_check_branch
          %294 = sbr.rel (%p292) target = $region52
        $region51: #{tpu_custom_call.1} parent=39 // pred_region
          %296 = dma.done [#allocation7], 128
        $region52: #{tpu_custom_call.1} parent=39 // pred_fallthru
          _
        // Predicated region
        $region53: #{tpu_custom_call.1} parent=39 // pred_check
          %p297 = pneg %p148
        $region54: #{tpu_custom_call.1} parent=39 // pred_check_branch
          %299 = sbr.rel (%p297) target = $region56
        $region55: #{tpu_custom_call.1} parent=39 // pred_region
          %301 = dma.done [#allocation10], 16
        $region56: #{tpu_custom_call.1} parent=39 // pred_fallthru
          _
        %s302 = sand.u32 %s46, 1
        %s303 = scalar_lea.sflag [#allocation4], %s302
        %s304 = sand.u32 %s46, 1
        %s305 = smul.addr %s304, 16
        %s306 = scalar_lea.vmem [#allocation3], %s305
        %p307 = pneg %p59
        %p308 = pneg %p56
        %s309 = sand.u32 %s24, 1
        %s310 = scalar_lea.sflag [#allocation7], %s309
        %s311 = sand.u32 %s72, 1
        %s312 = smul.addr %s311, 2048
        %s313 = scalar_lea.vmem [#allocation6], %s312
        %p314 = pneg %p85
        %p315 = pneg %p82
        %p316 = pneg %p106
        %p317 = pneg %p103
        %p318 = pneg %p127
        %p319 = pneg %p124
        %p320 = pneg %p148
        %p321 = pneg %p145
        %p322 = pneg %p174
        %p323 = pneg %p171
        %s324 = smul.u32 4, %s29
        %s325 = smul.u32 64, %s29
        %p326 = scmp.eq.s32.totalorder %s29, 0
        // Predicated region
        $region57: #{tpu_custom_call.1} parent=39 // pred_check
          %p327 = pneg %p326
        $region58: #{tpu_custom_call.1} parent=39 // pred_check_branch
          %329 = sbr.rel (%p327) target = $region60
        $region59: #{tpu_custom_call.1} parent=39 // pred_region
          %330 = vst [vmem:[#allocation2] sm:$0xff] 0.0
          %331 = vst [vmem:[#allocation2 + $0x8] sm:$0xff] 0.0
          %332 = vst [vmem:[#allocation2 + $0x10] sm:$0xff] 0.0
          %333 = vst [vmem:[#allocation2 + $0x18] sm:$0xff] 0.0
          %334 = vst [vmem:[#allocation2 + $0x20] sm:$0xff] 0.0
          %335 = vst [vmem:[#allocation2 + $0x28] sm:$0xff] 0.0
          %336 = vst [vmem:[#allocation2 + $0x30] sm:$0xff] 0.0
          %337 = vst [vmem:[#allocation2 + $0x38] sm:$0xff] 0.0
        $region60: #{tpu_custom_call.1} parent=39 // pred_fallthru
          _
        %v338 = vld [vmem:[#allocation2] sm:$0xff]
        %v339 = vld [vmem:[#allocation2 + $0x8] sm:$0xff]
        %v340 = vld [vmem:[#allocation2 + $0x10] sm:$0xff]
        %v341 = vld [vmem:[#allocation2 + $0x18] sm:$0xff]
        %v342 = vld [vmem:[#allocation2 + $0x20] sm:$0xff]
        %v343 = vld [vmem:[#allocation2 + $0x28] sm:$0xff]
        %v344 = vld [vmem:[#allocation2 + $0x30] sm:$0xff]
        %v345 = vld [vmem:[#allocation2 + $0x38] sm:$0xff]
        %v346 = vld [vmem:[%s276] sm:$0xff]
        %v347 = vld [vmem:[%s276 + $0x8] sm:$0xff]
        %v348 = vld [vmem:[%s286] sm:$0xff]
        %v349 = vld [vmem:[%s286 + $0x8] sm:$0xff]
        %v350 = vld [vmem:[%s286 + $0x10] sm:$0xff]
        %v351 = vld [vmem:[%s286 + $0x18] sm:$0xff]
        %v352 = vld [vmem:[%s286 + $0x20] sm:$0xff]
        %v353 = vld [vmem:[%s286 + $0x28] sm:$0xff]
        %v354 = vld [vmem:[%s286 + $0x30] sm:$0xff]
        %v355 = vld [vmem:[%s286 + $0x38] sm:$0xff]
        %v356 = vld [vmem:[%s286 + $0x40] sm:$0xff]
        %v357 = vld [vmem:[%s286 + $0x48] sm:$0xff]
        %v358 = vld [vmem:[%s286 + $0x50] sm:$0xff]
        %v359 = vld [vmem:[%s286 + $0x58] sm:$0xff]
        %v360 = vld [vmem:[%s286 + $0x60] sm:$0xff]
        %v361 = vld [vmem:[%s286 + $0x68] sm:$0xff]
        %v362 = vld [vmem:[%s286 + $0x70] sm:$0xff]
        %v363 = vld [vmem:[%s286 + $0x78] sm:$0xff]
        %v364 = vld [vmem:[%s286 + $0x80] sm:$0xff]
        %v365 = vld [vmem:[%s286 + $0x88] sm:$0xff]
        %v366 = vld [vmem:[%s286 + $0x90] sm:$0xff]
        %v367 = vld [vmem:[%s286 + $0x98] sm:$0xff]
        %v368 = vld [vmem:[%s286 + $0xa0] sm:$0xff]
        %v369 = vld [vmem:[%s286 + $0xa8] sm:$0xff]
        %v370 = vld [vmem:[%s286 + $0xb0] sm:$0xff]
        %v371 = vld [vmem:[%s286 + $0xb8] sm:$0xff]
        %v372 = vld [vmem:[%s286 + $0xc0] sm:$0xff]
        %v373 = vld [vmem:[%s286 + $0xc8] sm:$0xff]
        %v374 = vld [vmem:[%s286 + $0xd0] sm:$0xff]
        %v375 = vld [vmem:[%s286 + $0xd8] sm:$0xff]
        %v376 = vld [vmem:[%s286 + $0xe0] sm:$0xff]
        %v377 = vld [vmem:[%s286 + $0xe8] sm:$0xff]
        %v378 = vld [vmem:[%s286 + $0xf0] sm:$0xff]
        %v379 = vld [vmem:[%s286 + $0xf8] sm:$0xff]
        %v380 = vld [vmem:[%s286 + $0x100] sm:$0xff]
        %v381 = vld [vmem:[%s286 + $0x108] sm:$0xff]
        %v382 = vld [vmem:[%s286 + $0x110] sm:$0xff]
        %v383 = vld [vmem:[%s286 + $0x118] sm:$0xff]
        %v384 = vld [vmem:[%s286 + $0x120] sm:$0xff]
        %v385 = vld [vmem:[%s286 + $0x128] sm:$0xff]
        %v386 = vld [vmem:[%s286 + $0x130] sm:$0xff]
        %v387 = vld [vmem:[%s286 + $0x138] sm:$0xff]
        %v388 = vld [vmem:[%s286 + $0x140] sm:$0xff]
        %v389 = vld [vmem:[%s286 + $0x148] sm:$0xff]
        %v390 = vld [vmem:[%s286 + $0x150] sm:$0xff]
        %v391 = vld [vmem:[%s286 + $0x158] sm:$0xff]
        %v392 = vld [vmem:[%s286 + $0x160] sm:$0xff]
        %v393 = vld [vmem:[%s286 + $0x168] sm:$0xff]
        %v394 = vld [vmem:[%s286 + $0x170] sm:$0xff]
        %v395 = vld [vmem:[%s286 + $0x178] sm:$0xff]
        %v396 = vld [vmem:[%s286 + $0x180] sm:$0xff]
        %v397 = vld [vmem:[%s286 + $0x188] sm:$0xff]
        %v398 = vld [vmem:[%s286 + $0x190] sm:$0xff]
        %v399 = vld [vmem:[%s286 + $0x198] sm:$0xff]
        %v400 = vld [vmem:[%s286 + $0x1a0] sm:$0xff]
        %v401 = vld [vmem:[%s286 + $0x1a8] sm:$0xff]
        %v402 = vld [vmem:[%s286 + $0x1b0] sm:$0xff]
        %v403 = vld [vmem:[%s286 + $0x1b8] sm:$0xff]
        %v404 = vld [vmem:[%s286 + $0x1c0] sm:$0xff]
        %v405 = vld [vmem:[%s286 + $0x1c8] sm:$0xff]
        %v406 = vld [vmem:[%s286 + $0x1d0] sm:$0xff]
        %v407 = vld [vmem:[%s286 + $0x1d8] sm:$0xff]
        %v408 = vld [vmem:[%s286 + $0x1e0] sm:$0xff]
        %v409 = vld [vmem:[%s286 + $0x1e8] sm:$0xff]
        %v410 = vld [vmem:[%s286 + $0x1f0] sm:$0xff]
        %v411 = vld [vmem:[%s286 + $0x1f8] sm:$0xff]
        %v412 = vld [vmem:[%s286 + $0x200] sm:$0xff]
        %v413 = vld [vmem:[%s286 + $0x208] sm:$0xff]
        %v414 = vld [vmem:[%s286 + $0x210] sm:$0xff]
        %v415 = vld [vmem:[%s286 + $0x218] sm:$0xff]
        %v416 = vld [vmem:[%s286 + $0x220] sm:$0xff]
        %v417 = vld [vmem:[%s286 + $0x228] sm:$0xff]
        %v418 = vld [vmem:[%s286 + $0x230] sm:$0xff]
        %v419 = vld [vmem:[%s286 + $0x238] sm:$0xff]
        %v420 = vld [vmem:[%s286 + $0x240] sm:$0xff]
        %v421 = vld [vmem:[%s286 + $0x248] sm:$0xff]
        %v422 = vld [vmem:[%s286 + $0x250] sm:$0xff]
        %v423 = vld [vmem:[%s286 + $0x258] sm:$0xff]
        %v424 = vld [vmem:[%s286 + $0x260] sm:$0xff]
        %v425 = vld [vmem:[%s286 + $0x268] sm:$0xff]
        %v426 = vld [vmem:[%s286 + $0x270] sm:$0xff]
        %v427 = vld [vmem:[%s286 + $0x278] sm:$0xff]
        %v428 = vld [vmem:[%s286 + $0x280] sm:$0xff]
        %v429 = vld [vmem:[%s286 + $0x288] sm:$0xff]
        %v430 = vld [vmem:[%s286 + $0x290] sm:$0xff]
        %v431 = vld [vmem:[%s286 + $0x298] sm:$0xff]
        %v432 = vld [vmem:[%s286 + $0x2a0] sm:$0xff]
        %v433 = vld [vmem:[%s286 + $0x2a8] sm:$0xff]
        %v434 = vld [vmem:[%s286 + $0x2b0] sm:$0xff]
        %v435 = vld [vmem:[%s286 + $0x2b8] sm:$0xff]
        %v436 = vld [vmem:[%s286 + $0x2c0] sm:$0xff]
        %v437 = vld [vmem:[%s286 + $0x2c8] sm:$0xff]
        %v438 = vld [vmem:[%s286 + $0x2d0] sm:$0xff]
        %v439 = vld [vmem:[%s286 + $0x2d8] sm:$0xff]
        %v440 = vld [vmem:[%s286 + $0x2e0] sm:$0xff]
        %v441 = vld [vmem:[%s286 + $0x2e8] sm:$0xff]
        %v442 = vld [vmem:[%s286 + $0x2f0] sm:$0xff]
        %v443 = vld [vmem:[%s286 + $0x2f8] sm:$0xff]
        %v444 = vld [vmem:[%s286 + $0x300] sm:$0xff]
        %v445 = vld [vmem:[%s286 + $0x308] sm:$0xff]
        %v446 = vld [vmem:[%s286 + $0x310] sm:$0xff]
        %v447 = vld [vmem:[%s286 + $0x318] sm:$0xff]
        %v448 = vld [vmem:[%s286 + $0x320] sm:$0xff]
        %v449 = vld [vmem:[%s286 + $0x328] sm:$0xff]
        %v450 = vld [vmem:[%s286 + $0x330] sm:$0xff]
        %v451 = vld [vmem:[%s286 + $0x338] sm:$0xff]
        %v452 = vld [vmem:[%s286 + $0x340] sm:$0xff]
        %v453 = vld [vmem:[%s286 + $0x348] sm:$0xff]
        %v454 = vld [vmem:[%s286 + $0x350] sm:$0xff]
        %v455 = vld [vmem:[%s286 + $0x358] sm:$0xff]
        %v456 = vld [vmem:[%s286 + $0x360] sm:$0xff]
        %v457 = vld [vmem:[%s286 + $0x368] sm:$0xff]
        %v458 = vld [vmem:[%s286 + $0x370] sm:$0xff]
        %v459 = vld [vmem:[%s286 + $0x378] sm:$0xff]
        %v460 = vld [vmem:[%s286 + $0x380] sm:$0xff]
        %v461 = vld [vmem:[%s286 + $0x388] sm:$0xff]
        %v462 = vld [vmem:[%s286 + $0x390] sm:$0xff]
        %v463 = vld [vmem:[%s286 + $0x398] sm:$0xff]
        %v464 = vld [vmem:[%s286 + $0x3a0] sm:$0xff]
        %v465 = vld [vmem:[%s286 + $0x3a8] sm:$0xff]
        %v466 = vld [vmem:[%s286 + $0x3b0] sm:$0xff]
        %v467 = vld [vmem:[%s286 + $0x3b8] sm:$0xff]
        %v468 = vld [vmem:[%s286 + $0x3c0] sm:$0xff]
        %v469 = vld [vmem:[%s286 + $0x3c8] sm:$0xff]
        %v470 = vld [vmem:[%s286 + $0x3d0] sm:$0xff]
        %v471 = vld [vmem:[%s286 + $0x3d8] sm:$0xff]
        %v472 = vld [vmem:[%s286 + $0x3e0] sm:$0xff]
        %v473 = vld [vmem:[%s286 + $0x3e8] sm:$0xff]
        %v474 = vld [vmem:[%s286 + $0x3f0] sm:$0xff]
        %v475 = vld [vmem:[%s286 + $0x3f8] sm:$0xff]
        %v476 = vld [vmem:[%s286 + $0x400] sm:$0xff]
        %v477 = vld [vmem:[%s286 + $0x408] sm:$0xff]
        %v478 = vld [vmem:[%s286 + $0x410] sm:$0xff]
        %v479 = vld [vmem:[%s286 + $0x418] sm:$0xff]
        %v480 = vld [vmem:[%s286 + $0x420] sm:$0xff]
        %v481 = vld [vmem:[%s286 + $0x428] sm:$0xff]
        %v482 = vld [vmem:[%s286 + $0x430] sm:$0xff]
        %v483 = vld [vmem:[%s286 + $0x438] sm:$0xff]
        %v484 = vld [vmem:[%s286 + $0x440] sm:$0xff]
        %v485 = vld [vmem:[%s286 + $0x448] sm:$0xff]
        %v486 = vld [vmem:[%s286 + $0x450] sm:$0xff]
        %v487 = vld [vmem:[%s286 + $0x458] sm:$0xff]
        %v488 = vld [vmem:[%s286 + $0x460] sm:$0xff]
        %v489 = vld [vmem:[%s286 + $0x468] sm:$0xff]
        %v490 = vld [vmem:[%s286 + $0x470] sm:$0xff]
        %v491 = vld [vmem:[%s286 + $0x478] sm:$0xff]
        %v492 = vld [vmem:[%s286 + $0x480] sm:$0xff]
        %v493 = vld [vmem:[%s286 + $0x488] sm:$0xff]
        %v494 = vld [vmem:[%s286 + $0x490] sm:$0xff]
        %v495 = vld [vmem:[%s286 + $0x498] sm:$0xff]
        %v496 = vld [vmem:[%s286 + $0x4a0] sm:$0xff]
        %v497 = vld [vmem:[%s286 + $0x4a8] sm:$0xff]
        %v498 = vld [vmem:[%s286 + $0x4b0] sm:$0xff]
        %v499 = vld [vmem:[%s286 + $0x4b8] sm:$0xff]
        %v500 = vld [vmem:[%s286 + $0x4c0] sm:$0xff]
        %v501 = vld [vmem:[%s286 + $0x4c8] sm:$0xff]
        %v502 = vld [vmem:[%s286 + $0x4d0] sm:$0xff]
        %v503 = vld [vmem:[%s286 + $0x4d8] sm:$0xff]
        %v504 = vld [vmem:[%s286 + $0x4e0] sm:$0xff]
        %v505 = vld [vmem:[%s286 + $0x4e8] sm:$0xff]
        %v506 = vld [vmem:[%s286 + $0x4f0] sm:$0xff]
        %v507 = vld [vmem:[%s286 + $0x4f8] sm:$0xff]
        %v508 = vld [vmem:[%s286 + $0x500] sm:$0xff]
        %v509 = vld [vmem:[%s286 + $0x508] sm:$0xff]
        %v510 = vld [vmem:[%s286 + $0x510] sm:$0xff]
        %v511 = vld [vmem:[%s286 + $0x518] sm:$0xff]
        %v512 = vld [vmem:[%s286 + $0x520] sm:$0xff]
        %v513 = vld [vmem:[%s286 + $0x528] sm:$0xff]
        %v514 = vld [vmem:[%s286 + $0x530] sm:$0xff]
        %v515 = vld [vmem:[%s286 + $0x538] sm:$0xff]
        %v516 = vld [vmem:[%s286 + $0x540] sm:$0xff]
        %v517 = vld [vmem:[%s286 + $0x548] sm:$0xff]
        %v518 = vld [vmem:[%s286 + $0x550] sm:$0xff]
        %v519 = vld [vmem:[%s286 + $0x558] sm:$0xff]
        %v520 = vld [vmem:[%s286 + $0x560] sm:$0xff]
        %v521 = vld [vmem:[%s286 + $0x568] sm:$0xff]
        %v522 = vld [vmem:[%s286 + $0x570] sm:$0xff]
        %v523 = vld [vmem:[%s286 + $0x578] sm:$0xff]
        %v524 = vld [vmem:[%s286 + $0x580] sm:$0xff]
        %v525 = vld [vmem:[%s286 + $0x588] sm:$0xff]
        %v526 = vld [vmem:[%s286 + $0x590] sm:$0xff]
        %v527 = vld [vmem:[%s286 + $0x598] sm:$0xff]
        %v528 = vld [vmem:[%s286 + $0x5a0] sm:$0xff]
        %v529 = vld [vmem:[%s286 + $0x5a8] sm:$0xff]
        %v530 = vld [vmem:[%s286 + $0x5b0] sm:$0xff]
        %v531 = vld [vmem:[%s286 + $0x5b8] sm:$0xff]
        %v532 = vld [vmem:[%s286 + $0x5c0] sm:$0xff]
        %v533 = vld [vmem:[%s286 + $0x5c8] sm:$0xff]
        %v534 = vld [vmem:[%s286 + $0x5d0] sm:$0xff]
        %v535 = vld [vmem:[%s286 + $0x5d8] sm:$0xff]
        %v536 = vld [vmem:[%s286 + $0x5e0] sm:$0xff]
        %v537 = vld [vmem:[%s286 + $0x5e8] sm:$0xff]
        %v538 = vld [vmem:[%s286 + $0x5f0] sm:$0xff]
        %v539 = vld [vmem:[%s286 + $0x5f8] sm:$0xff]
        %v540 = vld [vmem:[%s286 + $0x600] sm:$0xff]
        %v541 = vld [vmem:[%s286 + $0x608] sm:$0xff]
        %v542 = vld [vmem:[%s286 + $0x610] sm:$0xff]
        %v543 = vld [vmem:[%s286 + $0x618] sm:$0xff]
        %v544 = vld [vmem:[%s286 + $0x620] sm:$0xff]
        %v545 = vld [vmem:[%s286 + $0x628] sm:$0xff]
        %v546 = vld [vmem:[%s286 + $0x630] sm:$0xff]
        %v547 = vld [vmem:[%s286 + $0x638] sm:$0xff]
        %v548 = vld [vmem:[%s286 + $0x640] sm:$0xff]
        %v549 = vld [vmem:[%s286 + $0x648] sm:$0xff]
        %v550 = vld [vmem:[%s286 + $0x650] sm:$0xff]
        %v551 = vld [vmem:[%s286 + $0x658] sm:$0xff]
        %v552 = vld [vmem:[%s286 + $0x660] sm:$0xff]
        %v553 = vld [vmem:[%s286 + $0x668] sm:$0xff]
        %v554 = vld [vmem:[%s286 + $0x670] sm:$0xff]
        %v555 = vld [vmem:[%s286 + $0x678] sm:$0xff]
        %v556 = vld [vmem:[%s286 + $0x680] sm:$0xff]
        %v557 = vld [vmem:[%s286 + $0x688] sm:$0xff]
        %v558 = vld [vmem:[%s286 + $0x690] sm:$0xff]
        %v559 = vld [vmem:[%s286 + $0x698] sm:$0xff]
        %v560 = vld [vmem:[%s286 + $0x6a0] sm:$0xff]
        %v561 = vld [vmem:[%s286 + $0x6a8] sm:$0xff]
        %v562 = vld [vmem:[%s286 + $0x6b0] sm:$0xff]
        %v563 = vld [vmem:[%s286 + $0x6b8] sm:$0xff]
        %v564 = vld [vmem:[%s286 + $0x6c0] sm:$0xff]
        %v565 = vld [vmem:[%s286 + $0x6c8] sm:$0xff]
        %v566 = vld [vmem:[%s286 + $0x6d0] sm:$0xff]
        %v567 = vld [vmem:[%s286 + $0x6d8] sm:$0xff]
        %v568 = vld [vmem:[%s286 + $0x6e0] sm:$0xff]
        %v569 = vld [vmem:[%s286 + $0x6e8] sm:$0xff]
        %v570 = vld [vmem:[%s286 + $0x6f0] sm:$0xff]
        %v571 = vld [vmem:[%s286 + $0x6f8] sm:$0xff]
        %v572 = vld [vmem:[%s286 + $0x700] sm:$0xff]
        %v573 = vld [vmem:[%s286 + $0x708] sm:$0xff]
        %v574 = vld [vmem:[%s286 + $0x710] sm:$0xff]
        %v575 = vld [vmem:[%s286 + $0x718] sm:$0xff]
        %v576 = vld [vmem:[%s286 + $0x720] sm:$0xff]
        %v577 = vld [vmem:[%s286 + $0x728] sm:$0xff]
        %v578 = vld [vmem:[%s286 + $0x730] sm:$0xff]
        %v579 = vld [vmem:[%s286 + $0x738] sm:$0xff]
        %v580 = vld [vmem:[%s286 + $0x740] sm:$0xff]
        %v581 = vld [vmem:[%s286 + $0x748] sm:$0xff]
        %v582 = vld [vmem:[%s286 + $0x750] sm:$0xff]
        %v583 = vld [vmem:[%s286 + $0x758] sm:$0xff]
        %v584 = vld [vmem:[%s286 + $0x760] sm:$0xff]
        %v585 = vld [vmem:[%s286 + $0x768] sm:$0xff]
        %v586 = vld [vmem:[%s286 + $0x770] sm:$0xff]
        %v587 = vld [vmem:[%s286 + $0x778] sm:$0xff]
        %v588 = vld [vmem:[%s286 + $0x780] sm:$0xff]
        %v589 = vld [vmem:[%s286 + $0x788] sm:$0xff]
        %v590 = vld [vmem:[%s286 + $0x790] sm:$0xff]
        %v591 = vld [vmem:[%s286 + $0x798] sm:$0xff]
        %v592 = vld [vmem:[%s286 + $0x7a0] sm:$0xff]
        %v593 = vld [vmem:[%s286 + $0x7a8] sm:$0xff]
        %v594 = vld [vmem:[%s286 + $0x7b0] sm:$0xff]
        %v595 = vld [vmem:[%s286 + $0x7b8] sm:$0xff]
        %v596 = vld [vmem:[%s286 + $0x7c0] sm:$0xff]
        %v597 = vld [vmem:[%s286 + $0x7c8] sm:$0xff]
        %v598 = vld [vmem:[%s286 + $0x7d0] sm:$0xff]
        %v599 = vld [vmem:[%s286 + $0x7d8] sm:$0xff]
        %v600 = vld [vmem:[%s286 + $0x7e0] sm:$0xff]
        %v601 = vld [vmem:[%s286 + $0x7e8] sm:$0xff]
        %v602 = vld [vmem:[%s286 + $0x7f0] sm:$0xff]
        %v603 = vld [vmem:[%s286 + $0x7f8] sm:$0xff]
        %v606 = vunpack.c.l.b16 %v346
        %v607 = vunpack.c.h.b16 %v346
        %v608 = vunpack.c.l.b16 %v347
        %v609 = vunpack.c.h.b16 %v347
        %v610 = vpack.c.b16 %v606, %v606
        %v611 = vpack.c.b16 %v607, %v607
        %v612 = vpack.c.b16 %v608, %v608
        %v613 = vpack.c.b16 %v609, %v609
        %v874 = vunpack.c.l.b16 %v348
        %v875 = vunpack.c.h.b16 %v348
        %v876 = vunpack.c.l.b16 %v349
        %v877 = vunpack.c.h.b16 %v349
        %v878 = vunpack.c.l.b16 %v350
        %v879 = vunpack.c.h.b16 %v350
        %v880 = vunpack.c.l.b16 %v351
        %v881 = vunpack.c.h.b16 %v351
        %v882 = vunpack.c.l.b16 %v352
        %v883 = vunpack.c.h.b16 %v352
        %v884 = vunpack.c.l.b16 %v353
        %v885 = vunpack.c.h.b16 %v353
        %v886 = vunpack.c.l.b16 %v354
        %v887 = vunpack.c.h.b16 %v354
        %v888 = vunpack.c.l.b16 %v355
        %v889 = vunpack.c.h.b16 %v355
        %v890 = vunpack.c.l.b16 %v356
        %v891 = vunpack.c.h.b16 %v356
        %v892 = vunpack.c.l.b16 %v357
        %v893 = vunpack.c.h.b16 %v357
        %v894 = vunpack.c.l.b16 %v358
        %v895 = vunpack.c.h.b16 %v358
        %v896 = vunpack.c.l.b16 %v359
        %v897 = vunpack.c.h.b16 %v359
        %v898 = vunpack.c.l.b16 %v360
        %v899 = vunpack.c.h.b16 %v360
        %v900 = vunpack.c.l.b16 %v361
        %v901 = vunpack.c.h.b16 %v361
        %v902 = vunpack.c.l.b16 %v362
        %v903 = vunpack.c.h.b16 %v362
        %v904 = vunpack.c.l.b16 %v363
        %v905 = vunpack.c.h.b16 %v363
        %v906 = vunpack.c.l.b16 %v364
        %v907 = vunpack.c.h.b16 %v364
        %v908 = vunpack.c.l.b16 %v365
        %v909 = vunpack.c.h.b16 %v365
        %v910 = vunpack.c.l.b16 %v366
        %v911 = vunpack.c.h.b16 %v366
        %v912 = vunpack.c.l.b16 %v367
        %v913 = vunpack.c.h.b16 %v367
        %v914 = vunpack.c.l.b16 %v368
        %v915 = vunpack.c.h.b16 %v368
        %v916 = vunpack.c.l.b16 %v369
        %v917 = vunpack.c.h.b16 %v369
        %v918 = vunpack.c.l.b16 %v370
        %v919 = vunpack.c.h.b16 %v370
        %v920 = vunpack.c.l.b16 %v371
        %v921 = vunpack.c.h.b16 %v371
        %v922 = vunpack.c.l.b16 %v372
        %v923 = vunpack.c.h.b16 %v372
        %v924 = vunpack.c.l.b16 %v373
        %v925 = vunpack.c.h.b16 %v373
        %v926 = vunpack.c.l.b16 %v374
        %v927 = vunpack.c.h.b16 %v374
        %v928 = vunpack.c.l.b16 %v375
        %v929 = vunpack.c.h.b16 %v375
        %v930 = vunpack.c.l.b16 %v376
        %v931 = vunpack.c.h.b16 %v376
        %v932 = vunpack.c.l.b16 %v377
        %v933 = vunpack.c.h.b16 %v377
        %v934 = vunpack.c.l.b16 %v378
        %v935 = vunpack.c.h.b16 %v378
        %v936 = vunpack.c.l.b16 %v379
        %v937 = vunpack.c.h.b16 %v379
        %v938 = vunpack.c.l.b16 %v380
        %v939 = vunpack.c.h.b16 %v380
        %v940 = vunpack.c.l.b16 %v381
        %v941 = vunpack.c.h.b16 %v381
        %v942 = vunpack.c.l.b16 %v382
        %v943 = vunpack.c.h.b16 %v382
        %v944 = vunpack.c.l.b16 %v383
        %v945 = vunpack.c.h.b16 %v383
        %v946 = vunpack.c.l.b16 %v384
        %v947 = vunpack.c.h.b16 %v384
        %v948 = vunpack.c.l.b16 %v385
        %v949 = vunpack.c.h.b16 %v385
        %v950 = vunpack.c.l.b16 %v386
        %v951 = vunpack.c.h.b16 %v386
        %v952 = vunpack.c.l.b16 %v387
        %v953 = vunpack.c.h.b16 %v387
        %v954 = vunpack.c.l.b16 %v388
        %v955 = vunpack.c.h.b16 %v388
        %v956 = vunpack.c.l.b16 %v389
        %v957 = vunpack.c.h.b16 %v389
        %v958 = vunpack.c.l.b16 %v390
        %v959 = vunpack.c.h.b16 %v390
        %v960 = vunpack.c.l.b16 %v391
        %v961 = vunpack.c.h.b16 %v391
        %v962 = vunpack.c.l.b16 %v392
        %v963 = vunpack.c.h.b16 %v392
        %v964 = vunpack.c.l.b16 %v393
        %v965 = vunpack.c.h.b16 %v393
        %v966 = vunpack.c.l.b16 %v394
        %v967 = vunpack.c.h.b16 %v394
        %v968 = vunpack.c.l.b16 %v395
        %v969 = vunpack.c.h.b16 %v395
        %v970 = vunpack.c.l.b16 %v396
        %v971 = vunpack.c.h.b16 %v396
        %v972 = vunpack.c.l.b16 %v397
        %v973 = vunpack.c.h.b16 %v397
        %v974 = vunpack.c.l.b16 %v398
        %v975 = vunpack.c.h.b16 %v398
        %v976 = vunpack.c.l.b16 %v399
        %v977 = vunpack.c.h.b16 %v399
        %v978 = vunpack.c.l.b16 %v400
        %v979 = vunpack.c.h.b16 %v400
        %v980 = vunpack.c.l.b16 %v401
        %v981 = vunpack.c.h.b16 %v401
        %v982 = vunpack.c.l.b16 %v402
        %v983 = vunpack.c.h.b16 %v402
        %v984 = vunpack.c.l.b16 %v403
        %v985 = vunpack.c.h.b16 %v403
        %v986 = vunpack.c.l.b16 %v404
        %v987 = vunpack.c.h.b16 %v404
        %v988 = vunpack.c.l.b16 %v405
        %v989 = vunpack.c.h.b16 %v405
        %v990 = vunpack.c.l.b16 %v406
        %v991 = vunpack.c.h.b16 %v406
        %v992 = vunpack.c.l.b16 %v407
        %v993 = vunpack.c.h.b16 %v407
        %v994 = vunpack.c.l.b16 %v408
        %v995 = vunpack.c.h.b16 %v408
        %v996 = vunpack.c.l.b16 %v409
        %v997 = vunpack.c.h.b16 %v409
        %v998 = vunpack.c.l.b16 %v410
        %v999 = vunpack.c.h.b16 %v410
        %v1000 = vunpack.c.l.b16 %v411
        %v1001 = vunpack.c.h.b16 %v411
        %v1002 = vunpack.c.l.b16 %v412
        %v1003 = vunpack.c.h.b16 %v412
        %v1004 = vunpack.c.l.b16 %v413
        %v1005 = vunpack.c.h.b16 %v413
        %v1006 = vunpack.c.l.b16 %v414
        %v1007 = vunpack.c.h.b16 %v414
        %v1008 = vunpack.c.l.b16 %v415
        %v1009 = vunpack.c.h.b16 %v415
        %v1010 = vunpack.c.l.b16 %v416
        %v1011 = vunpack.c.h.b16 %v416
        %v1012 = vunpack.c.l.b16 %v417
        %v1013 = vunpack.c.h.b16 %v417
        %v1014 = vunpack.c.l.b16 %v418
        %v1015 = vunpack.c.h.b16 %v418
        %v1016 = vunpack.c.l.b16 %v419
        %v1017 = vunpack.c.h.b16 %v419
        %v1018 = vunpack.c.l.b16 %v420
        %v1019 = vunpack.c.h.b16 %v420
        %v1020 = vunpack.c.l.b16 %v421
        %v1021 = vunpack.c.h.b16 %v421
        %v1022 = vunpack.c.l.b16 %v422
        %v1023 = vunpack.c.h.b16 %v422
        %v1024 = vunpack.c.l.b16 %v423
        %v1025 = vunpack.c.h.b16 %v423
        %v1026 = vunpack.c.l.b16 %v424
        %v1027 = vunpack.c.h.b16 %v424
        %v1028 = vunpack.c.l.b16 %v425
        %v1029 = vunpack.c.h.b16 %v425
        %v1030 = vunpack.c.l.b16 %v426
        %v1031 = vunpack.c.h.b16 %v426
        %v1032 = vunpack.c.l.b16 %v427
        %v1033 = vunpack.c.h.b16 %v427
        %v1034 = vunpack.c.l.b16 %v428
        %v1035 = vunpack.c.h.b16 %v428
        %v1036 = vunpack.c.l.b16 %v429
        %v1037 = vunpack.c.h.b16 %v429
        %v1038 = vunpack.c.l.b16 %v430
        %v1039 = vunpack.c.h.b16 %v430
        %v1040 = vunpack.c.l.b16 %v431
        %v1041 = vunpack.c.h.b16 %v431
        %v1042 = vunpack.c.l.b16 %v432
        %v1043 = vunpack.c.h.b16 %v432
        %v1044 = vunpack.c.l.b16 %v433
        %v1045 = vunpack.c.h.b16 %v433
        %v1046 = vunpack.c.l.b16 %v434
        %v1047 = vunpack.c.h.b16 %v434
        %v1048 = vunpack.c.l.b16 %v435
        %v1049 = vunpack.c.h.b16 %v435
        %v1050 = vunpack.c.l.b16 %v436
        %v1051 = vunpack.c.h.b16 %v436
        %v1052 = vunpack.c.l.b16 %v437
        %v1053 = vunpack.c.h.b16 %v437
        %v1054 = vunpack.c.l.b16 %v438
        %v1055 = vunpack.c.h.b16 %v438
        %v1056 = vunpack.c.l.b16 %v439
        %v1057 = vunpack.c.h.b16 %v439
        %v1058 = vunpack.c.l.b16 %v440
        %v1059 = vunpack.c.h.b16 %v440
        %v1060 = vunpack.c.l.b16 %v441
        %v1061 = vunpack.c.h.b16 %v441
        %v1062 = vunpack.c.l.b16 %v442
        %v1063 = vunpack.c.h.b16 %v442
        %v1064 = vunpack.c.l.b16 %v443
        %v1065 = vunpack.c.h.b16 %v443
        %v1066 = vunpack.c.l.b16 %v444
        %v1067 = vunpack.c.h.b16 %v444
        %v1068 = vunpack.c.l.b16 %v445
        %v1069 = vunpack.c.h.b16 %v445
        %v1070 = vunpack.c.l.b16 %v446
        %v1071 = vunpack.c.h.b16 %v446
        %v1072 = vunpack.c.l.b16 %v447
        %v1073 = vunpack.c.h.b16 %v447
        %v1074 = vunpack.c.l.b16 %v448
        %v1075 = vunpack.c.h.b16 %v448
        %v1076 = vunpack.c.l.b16 %v449
        %v1077 = vunpack.c.h.b16 %v449
        %v1078 = vunpack.c.l.b16 %v450
        %v1079 = vunpack.c.h.b16 %v450
        %v1080 = vunpack.c.l.b16 %v451
        %v1081 = vunpack.c.h.b16 %v451
        %v1082 = vunpack.c.l.b16 %v452
        %v1083 = vunpack.c.h.b16 %v452
        %v1084 = vunpack.c.l.b16 %v453
        %v1085 = vunpack.c.h.b16 %v453
        %v1086 = vunpack.c.l.b16 %v454
        %v1087 = vunpack.c.h.b16 %v454
        %v1088 = vunpack.c.l.b16 %v455
        %v1089 = vunpack.c.h.b16 %v455
        %v1090 = vunpack.c.l.b16 %v456
        %v1091 = vunpack.c.h.b16 %v456
        %v1092 = vunpack.c.l.b16 %v457
        %v1093 = vunpack.c.h.b16 %v457
        %v1094 = vunpack.c.l.b16 %v458
        %v1095 = vunpack.c.h.b16 %v458
        %v1096 = vunpack.c.l.b16 %v459
        %v1097 = vunpack.c.h.b16 %v459
        %v1098 = vunpack.c.l.b16 %v460
        %v1099 = vunpack.c.h.b16 %v460
        %v1100 = vunpack.c.l.b16 %v461
        %v1101 = vunpack.c.h.b16 %v461
        %v1102 = vunpack.c.l.b16 %v462
        %v1103 = vunpack.c.h.b16 %v462
        %v1104 = vunpack.c.l.b16 %v463
        %v1105 = vunpack.c.h.b16 %v463
        %v1106 = vunpack.c.l.b16 %v464
        %v1107 = vunpack.c.h.b16 %v464
        %v1108 = vunpack.c.l.b16 %v465
        %v1109 = vunpack.c.h.b16 %v465
        %v1110 = vunpack.c.l.b16 %v466
        %v1111 = vunpack.c.h.b16 %v466
        %v1112 = vunpack.c.l.b16 %v467
        %v1113 = vunpack.c.h.b16 %v467
        %v1114 = vunpack.c.l.b16 %v468
        %v1115 = vunpack.c.h.b16 %v468
        %v1116 = vunpack.c.l.b16 %v469
        %v1117 = vunpack.c.h.b16 %v469
        %v1118 = vunpack.c.l.b16 %v470
        %v1119 = vunpack.c.h.b16 %v470
        %v1120 = vunpack.c.l.b16 %v471
        %v1121 = vunpack.c.h.b16 %v471
        %v1122 = vunpack.c.l.b16 %v472
        %v1123 = vunpack.c.h.b16 %v472
        %v1124 = vunpack.c.l.b16 %v473
        %v1125 = vunpack.c.h.b16 %v473
        %v1126 = vunpack.c.l.b16 %v474
        %v1127 = vunpack.c.h.b16 %v474
        %v1128 = vunpack.c.l.b16 %v475
        %v1129 = vunpack.c.h.b16 %v475
        %v1130 = vunpack.c.l.b16 %v476
        %v1131 = vunpack.c.h.b16 %v476
        %v1132 = vunpack.c.l.b16 %v477
        %v1133 = vunpack.c.h.b16 %v477
        %v1134 = vunpack.c.l.b16 %v478
        %v1135 = vunpack.c.h.b16 %v478
        %v1136 = vunpack.c.l.b16 %v479
        %v1137 = vunpack.c.h.b16 %v479
        %v1138 = vunpack.c.l.b16 %v480
        %v1139 = vunpack.c.h.b16 %v480
        %v1140 = vunpack.c.l.b16 %v481
        %v1141 = vunpack.c.h.b16 %v481
        %v1142 = vunpack.c.l.b16 %v482
        %v1143 = vunpack.c.h.b16 %v482
        %v1144 = vunpack.c.l.b16 %v483
        %v1145 = vunpack.c.h.b16 %v483
        %v1146 = vunpack.c.l.b16 %v484
        %v1147 = vunpack.c.h.b16 %v484
        %v1148 = vunpack.c.l.b16 %v485
        %v1149 = vunpack.c.h.b16 %v485
        %v1150 = vunpack.c.l.b16 %v486
        %v1151 = vunpack.c.h.b16 %v486
        %v1152 = vunpack.c.l.b16 %v487
        %v1153 = vunpack.c.h.b16 %v487
        %v1154 = vunpack.c.l.b16 %v488
        %v1155 = vunpack.c.h.b16 %v488
        %v1156 = vunpack.c.l.b16 %v489
        %v1157 = vunpack.c.h.b16 %v489
        %v1158 = vunpack.c.l.b16 %v490
        %v1159 = vunpack.c.h.b16 %v490
        %v1160 = vunpack.c.l.b16 %v491
        %v1161 = vunpack.c.h.b16 %v491
        %v1162 = vunpack.c.l.b16 %v492
        %v1163 = vunpack.c.h.b16 %v492
        %v1164 = vunpack.c.l.b16 %v493
        %v1165 = vunpack.c.h.b16 %v493
        %v1166 = vunpack.c.l.b16 %v494
        %v1167 = vunpack.c.h.b16 %v494
        %v1168 = vunpack.c.l.b16 %v495
        %v1169 = vunpack.c.h.b16 %v495
        %v1170 = vunpack.c.l.b16 %v496
        %v1171 = vunpack.c.h.b16 %v496
        %v1172 = vunpack.c.l.b16 %v497
        %v1173 = vunpack.c.h.b16 %v497
        %v1174 = vunpack.c.l.b16 %v498
        %v1175 = vunpack.c.h.b16 %v498
        %v1176 = vunpack.c.l.b16 %v499
        %v1177 = vunpack.c.h.b16 %v499
        %v1178 = vunpack.c.l.b16 %v500
        %v1179 = vunpack.c.h.b16 %v500
        %v1180 = vunpack.c.l.b16 %v501
        %v1181 = vunpack.c.h.b16 %v501
        %v1182 = vunpack.c.l.b16 %v502
        %v1183 = vunpack.c.h.b16 %v502
        %v1184 = vunpack.c.l.b16 %v503
        %v1185 = vunpack.c.h.b16 %v503
        %v1186 = vunpack.c.l.b16 %v504
        %v1187 = vunpack.c.h.b16 %v504
        %v1188 = vunpack.c.l.b16 %v505
        %v1189 = vunpack.c.h.b16 %v505
        %v1190 = vunpack.c.l.b16 %v506
        %v1191 = vunpack.c.h.b16 %v506
        %v1192 = vunpack.c.l.b16 %v507
        %v1193 = vunpack.c.h.b16 %v507
        %v1194 = vunpack.c.l.b16 %v508
        %v1195 = vunpack.c.h.b16 %v508
        %v1196 = vunpack.c.l.b16 %v509
        %v1197 = vunpack.c.h.b16 %v509
        %v1198 = vunpack.c.l.b16 %v510
        %v1199 = vunpack.c.h.b16 %v510
        %v1200 = vunpack.c.l.b16 %v511
        %v1201 = vunpack.c.h.b16 %v511
        %v1202 = vunpack.c.l.b16 %v512
        %v1203 = vunpack.c.h.b16 %v512
        %v1204 = vunpack.c.l.b16 %v513
        %v1205 = vunpack.c.h.b16 %v513
        %v1206 = vunpack.c.l.b16 %v514
        %v1207 = vunpack.c.h.b16 %v514
        %v1208 = vunpack.c.l.b16 %v515
        %v1209 = vunpack.c.h.b16 %v515
        %v1210 = vunpack.c.l.b16 %v516
        %v1211 = vunpack.c.h.b16 %v516
        %v1212 = vunpack.c.l.b16 %v517
        %v1213 = vunpack.c.h.b16 %v517
        %v1214 = vunpack.c.l.b16 %v518
        %v1215 = vunpack.c.h.b16 %v518
        %v1216 = vunpack.c.l.b16 %v519
        %v1217 = vunpack.c.h.b16 %v519
        %v1218 = vunpack.c.l.b16 %v520
        %v1219 = vunpack.c.h.b16 %v520
        %v1220 = vunpack.c.l.b16 %v521
        %v1221 = vunpack.c.h.b16 %v521
        %v1222 = vunpack.c.l.b16 %v522
        %v1223 = vunpack.c.h.b16 %v522
        %v1224 = vunpack.c.l.b16 %v523
        %v1225 = vunpack.c.h.b16 %v523
        %v1226 = vunpack.c.l.b16 %v524
        %v1227 = vunpack.c.h.b16 %v524
        %v1228 = vunpack.c.l.b16 %v525
        %v1229 = vunpack.c.h.b16 %v525
        %v1230 = vunpack.c.l.b16 %v526
        %v1231 = vunpack.c.h.b16 %v526
        %v1232 = vunpack.c.l.b16 %v527
        %v1233 = vunpack.c.h.b16 %v527
        %v1234 = vunpack.c.l.b16 %v528
        %v1235 = vunpack.c.h.b16 %v528
        %v1236 = vunpack.c.l.b16 %v529
        %v1237 = vunpack.c.h.b16 %v529
        %v1238 = vunpack.c.l.b16 %v530
        %v1239 = vunpack.c.h.b16 %v530
        %v1240 = vunpack.c.l.b16 %v531
        %v1241 = vunpack.c.h.b16 %v531
        %v1242 = vunpack.c.l.b16 %v532
        %v1243 = vunpack.c.h.b16 %v532
        %v1244 = vunpack.c.l.b16 %v533
        %v1245 = vunpack.c.h.b16 %v533
        %v1246 = vunpack.c.l.b16 %v534
        %v1247 = vunpack.c.h.b16 %v534
        %v1248 = vunpack.c.l.b16 %v535
        %v1249 = vunpack.c.h.b16 %v535
        %v1250 = vunpack.c.l.b16 %v536
        %v1251 = vunpack.c.h.b16 %v536
        %v1252 = vunpack.c.l.b16 %v537
        %v1253 = vunpack.c.h.b16 %v537
        %v1254 = vunpack.c.l.b16 %v538
        %v1255 = vunpack.c.h.b16 %v538
        %v1256 = vunpack.c.l.b16 %v539
        %v1257 = vunpack.c.h.b16 %v539
        %v1258 = vunpack.c.l.b16 %v540
        %v1259 = vunpack.c.h.b16 %v540
        %v1260 = vunpack.c.l.b16 %v541
        %v1261 = vunpack.c.h.b16 %v541
        %v1262 = vunpack.c.l.b16 %v542
        %v1263 = vunpack.c.h.b16 %v542
        %v1264 = vunpack.c.l.b16 %v543
        %v1265 = vunpack.c.h.b16 %v543
        %v1266 = vunpack.c.l.b16 %v544
        %v1267 = vunpack.c.h.b16 %v544
        %v1268 = vunpack.c.l.b16 %v545
        %v1269 = vunpack.c.h.b16 %v545
        %v1270 = vunpack.c.l.b16 %v546
        %v1271 = vunpack.c.h.b16 %v546
        %v1272 = vunpack.c.l.b16 %v547
        %v1273 = vunpack.c.h.b16 %v547
        %v1274 = vunpack.c.l.b16 %v548
        %v1275 = vunpack.c.h.b16 %v548
        %v1276 = vunpack.c.l.b16 %v549
        %v1277 = vunpack.c.h.b16 %v549
        %v1278 = vunpack.c.l.b16 %v550
        %v1279 = vunpack.c.h.b16 %v550
        %v1280 = vunpack.c.l.b16 %v551
        %v1281 = vunpack.c.h.b16 %v551
        %v1282 = vunpack.c.l.b16 %v552
        %v1283 = vunpack.c.h.b16 %v552
        %v1284 = vunpack.c.l.b16 %v553
        %v1285 = vunpack.c.h.b16 %v553
        %v1286 = vunpack.c.l.b16 %v554
        %v1287 = vunpack.c.h.b16 %v554
        %v1288 = vunpack.c.l.b16 %v555
        %v1289 = vunpack.c.h.b16 %v555
        %v1290 = vunpack.c.l.b16 %v556
        %v1291 = vunpack.c.h.b16 %v556
        %v1292 = vunpack.c.l.b16 %v557
        %v1293 = vunpack.c.h.b16 %v557
        %v1294 = vunpack.c.l.b16 %v558
        %v1295 = vunpack.c.h.b16 %v558
        %v1296 = vunpack.c.l.b16 %v559
        %v1297 = vunpack.c.h.b16 %v559
        %v1298 = vunpack.c.l.b16 %v560
        %v1299 = vunpack.c.h.b16 %v560
        %v1300 = vunpack.c.l.b16 %v561
        %v1301 = vunpack.c.h.b16 %v561
        %v1302 = vunpack.c.l.b16 %v562
        %v1303 = vunpack.c.h.b16 %v562
        %v1304 = vunpack.c.l.b16 %v563
        %v1305 = vunpack.c.h.b16 %v563
        %v1306 = vunpack.c.l.b16 %v564
        %v1307 = vunpack.c.h.b16 %v564
        %v1308 = vunpack.c.l.b16 %v565
        %v1309 = vunpack.c.h.b16 %v565
        %v1310 = vunpack.c.l.b16 %v566
        %v1311 = vunpack.c.h.b16 %v566
        %v1312 = vunpack.c.l.b16 %v567
        %v1313 = vunpack.c.h.b16 %v567
        %v1314 = vunpack.c.l.b16 %v568
        %v1315 = vunpack.c.h.b16 %v568
        %v1316 = vunpack.c.l.b16 %v569
        %v1317 = vunpack.c.h.b16 %v569
        %v1318 = vunpack.c.l.b16 %v570
        %v1319 = vunpack.c.h.b16 %v570
        %v1320 = vunpack.c.l.b16 %v571
        %v1321 = vunpack.c.h.b16 %v571
        %v1322 = vunpack.c.l.b16 %v572
        %v1323 = vunpack.c.h.b16 %v572
        %v1324 = vunpack.c.l.b16 %v573
        %v1325 = vunpack.c.h.b16 %v573
        %v1326 = vunpack.c.l.b16 %v574
        %v1327 = vunpack.c.h.b16 %v574
        %v1328 = vunpack.c.l.b16 %v575
        %v1329 = vunpack.c.h.b16 %v575
        %v1330 = vunpack.c.l.b16 %v576
        %v1331 = vunpack.c.h.b16 %v576
        %v1332 = vunpack.c.l.b16 %v577
        %v1333 = vunpack.c.h.b16 %v577
        %v1334 = vunpack.c.l.b16 %v578
        %v1335 = vunpack.c.h.b16 %v578
        %v1336 = vunpack.c.l.b16 %v579
        %v1337 = vunpack.c.h.b16 %v579
        %v1338 = vunpack.c.l.b16 %v580
        %v1339 = vunpack.c.h.b16 %v580
        %v1340 = vunpack.c.l.b16 %v581
        %v1341 = vunpack.c.h.b16 %v581
        %v1342 = vunpack.c.l.b16 %v582
        %v1343 = vunpack.c.h.b16 %v582
        %v1344 = vunpack.c.l.b16 %v583
        %v1345 = vunpack.c.h.b16 %v583
        %v1346 = vunpack.c.l.b16 %v584
        %v1347 = vunpack.c.h.b16 %v584
        %v1348 = vunpack.c.l.b16 %v585
        %v1349 = vunpack.c.h.b16 %v585
        %v1350 = vunpack.c.l.b16 %v586
        %v1351 = vunpack.c.h.b16 %v586
        %v1352 = vunpack.c.l.b16 %v587
        %v1353 = vunpack.c.h.b16 %v587
        %v1354 = vunpack.c.l.b16 %v588
        %v1355 = vunpack.c.h.b16 %v588
        %v1356 = vunpack.c.l.b16 %v589
        %v1357 = vunpack.c.h.b16 %v589
        %v1358 = vunpack.c.l.b16 %v590
        %v1359 = vunpack.c.h.b16 %v590
        %v1360 = vunpack.c.l.b16 %v591
        %v1361 = vunpack.c.h.b16 %v591
        %v1362 = vunpack.c.l.b16 %v592
        %v1363 = vunpack.c.h.b16 %v592
        %v1364 = vunpack.c.l.b16 %v593
        %v1365 = vunpack.c.h.b16 %v593
        %v1366 = vunpack.c.l.b16 %v594
        %v1367 = vunpack.c.h.b16 %v594
        %v1368 = vunpack.c.l.b16 %v595
        %v1369 = vunpack.c.h.b16 %v595
        %v1370 = vunpack.c.l.b16 %v596
        %v1371 = vunpack.c.h.b16 %v596
        %v1372 = vunpack.c.l.b16 %v597
        %v1373 = vunpack.c.h.b16 %v597
        %v1374 = vunpack.c.l.b16 %v598
        %v1375 = vunpack.c.h.b16 %v598
        %v1376 = vunpack.c.l.b16 %v599
        %v1377 = vunpack.c.h.b16 %v599
        %v1378 = vunpack.c.l.b16 %v600
        %v1379 = vunpack.c.h.b16 %v600
        %v1380 = vunpack.c.l.b16 %v601
        %v1381 = vunpack.c.h.b16 %v601
        %v1382 = vunpack.c.l.b16 %v602
        %v1383 = vunpack.c.h.b16 %v602
        %v1384 = vunpack.c.l.b16 %v603
        %v1385 = vunpack.c.h.b16 %v603
        %v1386 = vpack.c.b16 %v882, %v874
        %v1387 = vpack.c.b16 %v883, %v875
        %v1388 = vpack.c.b16 %v884, %v876
        %v1389 = vpack.c.b16 %v885, %v877
        %v1390 = vpack.c.b16 %v886, %v878
        %v1391 = vpack.c.b16 %v887, %v879
        %v1392 = vpack.c.b16 %v888, %v880
        %v1393 = vpack.c.b16 %v889, %v881
        %v1394 = vpack.c.b16 %v898, %v890
        %v1395 = vpack.c.b16 %v899, %v891
        %v1396 = vpack.c.b16 %v900, %v892
        %v1397 = vpack.c.b16 %v901, %v893
        %v1398 = vpack.c.b16 %v902, %v894
        %v1399 = vpack.c.b16 %v903, %v895
        %v1400 = vpack.c.b16 %v904, %v896
        %v1401 = vpack.c.b16 %v905, %v897
        %v1402 = vpack.c.b16 %v914, %v906
        %v1403 = vpack.c.b16 %v915, %v907
        %v1404 = vpack.c.b16 %v916, %v908
        %v1405 = vpack.c.b16 %v917, %v909
        %v1406 = vpack.c.b16 %v918, %v910
        %v1407 = vpack.c.b16 %v919, %v911
        %v1408 = vpack.c.b16 %v920, %v912
        %v1409 = vpack.c.b16 %v921, %v913
        %v1410 = vpack.c.b16 %v930, %v922
        %v1411 = vpack.c.b16 %v931, %v923
        %v1412 = vpack.c.b16 %v932, %v924
        %v1413 = vpack.c.b16 %v933, %v925
        %v1414 = vpack.c.b16 %v934, %v926
        %v1415 = vpack.c.b16 %v935, %v927
        %v1416 = vpack.c.b16 %v936, %v928
        %v1417 = vpack.c.b16 %v937, %v929
        %v1418 = vpack.c.b16 %v946, %v938
        %v1419 = vpack.c.b16 %v947, %v939
        %v1420 = vpack.c.b16 %v948, %v940
        %v1421 = vpack.c.b16 %v949, %v941
        %v1422 = vpack.c.b16 %v950, %v942
        %v1423 = vpack.c.b16 %v951, %v943
        %v1424 = vpack.c.b16 %v952, %v944
        %v1425 = vpack.c.b16 %v953, %v945
        %v1426 = vpack.c.b16 %v962, %v954
        %v1427 = vpack.c.b16 %v963, %v955
        %v1428 = vpack.c.b16 %v964, %v956
        %v1429 = vpack.c.b16 %v965, %v957
        %v1430 = vpack.c.b16 %v966, %v958
        %v1431 = vpack.c.b16 %v967, %v959
        %v1432 = vpack.c.b16 %v968, %v960
        %v1433 = vpack.c.b16 %v969, %v961
        %v1434 = vpack.c.b16 %v978, %v970
        %v1435 = vpack.c.b16 %v979, %v971
        %v1436 = vpack.c.b16 %v980, %v972
        %v1437 = vpack.c.b16 %v981, %v973
        %v1438 = vpack.c.b16 %v982, %v974
        %v1439 = vpack.c.b16 %v983, %v975
        %v1440 = vpack.c.b16 %v984, %v976
        %v1441 = vpack.c.b16 %v985, %v977
        %v1442 = vpack.c.b16 %v994, %v986
        %v1443 = vpack.c.b16 %v995, %v987
        %v1444 = vpack.c.b16 %v996, %v988
        %v1445 = vpack.c.b16 %v997, %v989
        %v1446 = vpack.c.b16 %v998, %v990
        %v1447 = vpack.c.b16 %v999, %v991
        %v1448 = vpack.c.b16 %v1000, %v992
        %v1449 = vpack.c.b16 %v1001, %v993
        %v1450 = vpack.c.b16 %v1010, %v1002
        %v1451 = vpack.c.b16 %v1011, %v1003
        %v1452 = vpack.c.b16 %v1012, %v1004
        %v1453 = vpack.c.b16 %v1013, %v1005
        %v1454 = vpack.c.b16 %v1014, %v1006
        %v1455 = vpack.c.b16 %v1015, %v1007
        %v1456 = vpack.c.b16 %v1016, %v1008
        %v1457 = vpack.c.b16 %v1017, %v1009
        %v1458 = vpack.c.b16 %v1026, %v1018
        %v1459 = vpack.c.b16 %v1027, %v1019
        %v1460 = vpack.c.b16 %v1028, %v1020
        %v1461 = vpack.c.b16 %v1029, %v1021
        %v1462 = vpack.c.b16 %v1030, %v1022
        %v1463 = vpack.c.b16 %v1031, %v1023
        %v1464 = vpack.c.b16 %v1032, %v1024
        %v1465 = vpack.c.b16 %v1033, %v1025
        %v1466 = vpack.c.b16 %v1042, %v1034
        %v1467 = vpack.c.b16 %v1043, %v1035
        %v1468 = vpack.c.b16 %v1044, %v1036
        %v1469 = vpack.c.b16 %v1045, %v1037
        %v1470 = vpack.c.b16 %v1046, %v1038
        %v1471 = vpack.c.b16 %v1047, %v1039
        %v1472 = vpack.c.b16 %v1048, %v1040
        %v1473 = vpack.c.b16 %v1049, %v1041
        %v1474 = vpack.c.b16 %v1058, %v1050
        %v1475 = vpack.c.b16 %v1059, %v1051
        %v1476 = vpack.c.b16 %v1060, %v1052
        %v1477 = vpack.c.b16 %v1061, %v1053
        %v1478 = vpack.c.b16 %v1062, %v1054
        %v1479 = vpack.c.b16 %v1063, %v1055
        %v1480 = vpack.c.b16 %v1064, %v1056
        %v1481 = vpack.c.b16 %v1065, %v1057
        %v1482 = vpack.c.b16 %v1074, %v1066
        %v1483 = vpack.c.b16 %v1075, %v1067
        %v1484 = vpack.c.b16 %v1076, %v1068
        %v1485 = vpack.c.b16 %v1077, %v1069
        %v1486 = vpack.c.b16 %v1078, %v1070
        %v1487 = vpack.c.b16 %v1079, %v1071
        %v1488 = vpack.c.b16 %v1080, %v1072
        %v1489 = vpack.c.b16 %v1081, %v1073
        %v1490 = vpack.c.b16 %v1090, %v1082
        %v1491 = vpack.c.b16 %v1091, %v1083
        %v1492 = vpack.c.b16 %v1092, %v1084
        %v1493 = vpack.c.b16 %v1093, %v1085
        %v1494 = vpack.c.b16 %v1094, %v1086
        %v1495 = vpack.c.b16 %v1095, %v1087
        %v1496 = vpack.c.b16 %v1096, %v1088
        %v1497 = vpack.c.b16 %v1097, %v1089
        %v1498 = vpack.c.b16 %v1106, %v1098
        %v1499 = vpack.c.b16 %v1107, %v1099
        %v1500 = vpack.c.b16 %v1108, %v1100
        %v1501 = vpack.c.b16 %v1109, %v1101
        %v1502 = vpack.c.b16 %v1110, %v1102
        %v1503 = vpack.c.b16 %v1111, %v1103
        %v1504 = vpack.c.b16 %v1112, %v1104
        %v1505 = vpack.c.b16 %v1113, %v1105
        %v1506 = vpack.c.b16 %v1122, %v1114
        %v1507 = vpack.c.b16 %v1123, %v1115
        %v1508 = vpack.c.b16 %v1124, %v1116
        %v1509 = vpack.c.b16 %v1125, %v1117
        %v1510 = vpack.c.b16 %v1126, %v1118
        %v1511 = vpack.c.b16 %v1127, %v1119
        %v1512 = vpack.c.b16 %v1128, %v1120
        %v1513 = vpack.c.b16 %v1129, %v1121
        %v1514 = vpack.c.b16 %v1138, %v1130
        %v1515 = vpack.c.b16 %v1139, %v1131
        %v1516 = vpack.c.b16 %v1140, %v1132
        %v1517 = vpack.c.b16 %v1141, %v1133
        %v1518 = vpack.c.b16 %v1142, %v1134
        %v1519 = vpack.c.b16 %v1143, %v1135
        %v1520 = vpack.c.b16 %v1144, %v1136
        %v1521 = vpack.c.b16 %v1145, %v1137
        %v1522 = vpack.c.b16 %v1154, %v1146
        %v1523 = vpack.c.b16 %v1155, %v1147
        %v1524 = vpack.c.b16 %v1156, %v1148
        %v1525 = vpack.c.b16 %v1157, %v1149
        %v1526 = vpack.c.b16 %v1158, %v1150
        %v1527 = vpack.c.b16 %v1159, %v1151
        %v1528 = vpack.c.b16 %v1160, %v1152
        %v1529 = vpack.c.b16 %v1161, %v1153
        %v1530 = vpack.c.b16 %v1170, %v1162
        %v1531 = vpack.c.b16 %v1171, %v1163
        %v1532 = vpack.c.b16 %v1172, %v1164
        %v1533 = vpack.c.b16 %v1173, %v1165
        %v1534 = vpack.c.b16 %v1174, %v1166
        %v1535 = vpack.c.b16 %v1175, %v1167
        %v1536 = vpack.c.b16 %v1176, %v1168
        %v1537 = vpack.c.b16 %v1177, %v1169
        %v1538 = vpack.c.b16 %v1186, %v1178
        %v1539 = vpack.c.b16 %v1187, %v1179
        %v1540 = vpack.c.b16 %v1188, %v1180
        %v1541 = vpack.c.b16 %v1189, %v1181
        %v1542 = vpack.c.b16 %v1190, %v1182
        %v1543 = vpack.c.b16 %v1191, %v1183
        %v1544 = vpack.c.b16 %v1192, %v1184
        %v1545 = vpack.c.b16 %v1193, %v1185
        %v1546 = vpack.c.b16 %v1202, %v1194
        %v1547 = vpack.c.b16 %v1203, %v1195
        %v1548 = vpack.c.b16 %v1204, %v1196
        %v1549 = vpack.c.b16 %v1205, %v1197
        %v1550 = vpack.c.b16 %v1206, %v1198
        %v1551 = vpack.c.b16 %v1207, %v1199
        %v1552 = vpack.c.b16 %v1208, %v1200
        %v1553 = vpack.c.b16 %v1209, %v1201
        %v1554 = vpack.c.b16 %v1218, %v1210
        %v1555 = vpack.c.b16 %v1219, %v1211
        %v1556 = vpack.c.b16 %v1220, %v1212
        %v1557 = vpack.c.b16 %v1221, %v1213
        %v1558 = vpack.c.b16 %v1222, %v1214
        %v1559 = vpack.c.b16 %v1223, %v1215
        %v1560 = vpack.c.b16 %v1224, %v1216
        %v1561 = vpack.c.b16 %v1225, %v1217
        %v1562 = vpack.c.b16 %v1234, %v1226
        %v1563 = vpack.c.b16 %v1235, %v1227
        %v1564 = vpack.c.b16 %v1236, %v1228
        %v1565 = vpack.c.b16 %v1237, %v1229
        %v1566 = vpack.c.b16 %v1238, %v1230
        %v1567 = vpack.c.b16 %v1239, %v1231
        %v1568 = vpack.c.b16 %v1240, %v1232
        %v1569 = vpack.c.b16 %v1241, %v1233
        %v1570 = vpack.c.b16 %v1250, %v1242
        %v1571 = vpack.c.b16 %v1251, %v1243
        %v1572 = vpack.c.b16 %v1252, %v1244
        %v1573 = vpack.c.b16 %v1253, %v1245
        %v1574 = vpack.c.b16 %v1254, %v1246
        %v1575 = vpack.c.b16 %v1255, %v1247
        %v1576 = vpack.c.b16 %v1256, %v1248
        %v1577 = vpack.c.b16 %v1257, %v1249
        %v1578 = vpack.c.b16 %v1266, %v1258
        %v1579 = vpack.c.b16 %v1267, %v1259
        %v1580 = vpack.c.b16 %v1268, %v1260
        %v1581 = vpack.c.b16 %v1269, %v1261
        %v1582 = vpack.c.b16 %v1270, %v1262
        %v1583 = vpack.c.b16 %v1271, %v1263
        %v1584 = vpack.c.b16 %v1272, %v1264
        %v1585 = vpack.c.b16 %v1273, %v1265
        %v1586 = vpack.c.b16 %v1282, %v1274
        %v1587 = vpack.c.b16 %v1283, %v1275
        %v1588 = vpack.c.b16 %v1284, %v1276
        %v1589 = vpack.c.b16 %v1285, %v1277
        %v1590 = vpack.c.b16 %v1286, %v1278
        %v1591 = vpack.c.b16 %v1287, %v1279
        %v1592 = vpack.c.b16 %v1288, %v1280
        %v1593 = vpack.c.b16 %v1289, %v1281
        %v1594 = vpack.c.b16 %v1298, %v1290
        %v1595 = vpack.c.b16 %v1299, %v1291
        %v1596 = vpack.c.b16 %v1300, %v1292
        %v1597 = vpack.c.b16 %v1301, %v1293
        %v1598 = vpack.c.b16 %v1302, %v1294
        %v1599 = vpack.c.b16 %v1303, %v1295
        %v1600 = vpack.c.b16 %v1304, %v1296
        %v1601 = vpack.c.b16 %v1305, %v1297
        %v1602 = vpack.c.b16 %v1314, %v1306
        %v1603 = vpack.c.b16 %v1315, %v1307
        %v1604 = vpack.c.b16 %v1316, %v1308
        %v1605 = vpack.c.b16 %v1317, %v1309
        %v1606 = vpack.c.b16 %v1318, %v1310
        %v1607 = vpack.c.b16 %v1319, %v1311
        %v1608 = vpack.c.b16 %v1320, %v1312
        %v1609 = vpack.c.b16 %v1321, %v1313
        %v1610 = vpack.c.b16 %v1330, %v1322
        %v1611 = vpack.c.b16 %v1331, %v1323
        %v1612 = vpack.c.b16 %v1332, %v1324
        %v1613 = vpack.c.b16 %v1333, %v1325
        %v1614 = vpack.c.b16 %v1334, %v1326
        %v1615 = vpack.c.b16 %v1335, %v1327
        %v1616 = vpack.c.b16 %v1336, %v1328
        %v1617 = vpack.c.b16 %v1337, %v1329
        %v1618 = vpack.c.b16 %v1346, %v1338
        %v1619 = vpack.c.b16 %v1347, %v1339
        %v1620 = vpack.c.b16 %v1348, %v1340
        %v1621 = vpack.c.b16 %v1349, %v1341
        %v1622 = vpack.c.b16 %v1350, %v1342
        %v1623 = vpack.c.b16 %v1351, %v1343
        %v1624 = vpack.c.b16 %v1352, %v1344
        %v1625 = vpack.c.b16 %v1353, %v1345
        %v1626 = vpack.c.b16 %v1362, %v1354
        %v1627 = vpack.c.b16 %v1363, %v1355
        %v1628 = vpack.c.b16 %v1364, %v1356
        %v1629 = vpack.c.b16 %v1365, %v1357
        %v1630 = vpack.c.b16 %v1366, %v1358
        %v1631 = vpack.c.b16 %v1367, %v1359
        %v1632 = vpack.c.b16 %v1368, %v1360
        %v1633 = vpack.c.b16 %v1369, %v1361
        %v1634 = vpack.c.b16 %v1378, %v1370
        %v1635 = vpack.c.b16 %v1379, %v1371
        %v1636 = vpack.c.b16 %v1380, %v1372
        %v1637 = vpack.c.b16 %v1381, %v1373
        %v1638 = vpack.c.b16 %v1382, %v1374
        %v1639 = vpack.c.b16 %v1383, %v1375
        %v1640 = vpack.c.b16 %v1384, %v1376
        %v1641 = vpack.c.b16 %v1385, %v1377
        %1898 = vmatpush.bf16.msra.mxu0 %v1442
        %1899 = vmatpush.bf16.msra.mxu0 %v1434
        %1900 = vmatpush.bf16.msra.mxu0 %v1426
        %1901 = vmatpush.bf16.msra.mxu0 %v1418
        %1902 = vmatpush.bf16.msra.mxu0 %v1410
        %1903 = vmatpush.bf16.msra.mxu0 %v1402
        %1904 = vmatpush.bf16.msra.mxu0 %v1394
        %1905 = vmatpush.bf16.msra.mxu0 %v1386
        %1906 = vmatmul.bf16.gmra.mxu0 %v610
        %v1907 = vpop.f32.mrf.mxu0
        %v1908 = vadd.f32 0.0, %v1907
        %v1909 = vpop.f32.mrf.mxu0
        %1910 = vdwg.mxu0
        %1911 = vmatpush.bf16.msra.mxu0 %v1506
        %1912 = vmatpush.bf16.msra.mxu0 %v1498
        %1913 = vmatpush.bf16.msra.mxu0 %v1490
        %1914 = vmatpush.bf16.msra.mxu0 %v1482
        %1915 = vmatpush.bf16.msra.mxu0 %v1474
        %1916 = vmatpush.bf16.msra.mxu0 %v1466
        %1917 = vmatpush.bf16.msra.mxu0 %v1458
        %1918 = vmatpush.bf16.msra.mxu0 %v1450
        %1919 = vmatmul.bf16.gmra.mxu0 %v611
        %v1920 = vpop.f32.mrf.mxu0
        %v1921 = vadd.f32 %v1908, %v1920
        %v1922 = vpop.f32.mrf.mxu0
        %1923 = vdwg.mxu0
        %1924 = vmatpush.bf16.msra.mxu0 %v1570
        %1925 = vmatpush.bf16.msra.mxu0 %v1562
        %1926 = vmatpush.bf16.msra.mxu0 %v1554
        %1927 = vmatpush.bf16.msra.mxu0 %v1546
        %1928 = vmatpush.bf16.msra.mxu0 %v1538
        %1929 = vmatpush.bf16.msra.mxu0 %v1530
        %1930 = vmatpush.bf16.msra.mxu0 %v1522
        %1931 = vmatpush.bf16.msra.mxu0 %v1514
        %1932 = vmatmul.bf16.gmra.mxu0 %v612
        %v1933 = vpop.f32.mrf.mxu0
        %v1934 = vadd.f32 %v1921, %v1933
        %v1935 = vpop.f32.mrf.mxu0
        %1936 = vdwg.mxu0
        %1937 = vmatpush.bf16.msra.mxu0 %v1634
        %1938 = vmatpush.bf16.msra.mxu0 %v1626
        %1939 = vmatpush.bf16.msra.mxu0 %v1618
        %1940 = vmatpush.bf16.msra.mxu0 %v1610
        %1941 = vmatpush.bf16.msra.mxu0 %v1602
        %1942 = vmatpush.bf16.msra.mxu0 %v1594
        %1943 = vmatpush.bf16.msra.mxu0 %v1586
        %1944 = vmatpush.bf16.msra.mxu0 %v1578
        %1945 = vmatmul.bf16.gmra.mxu0 %v613
        %v1946 = vpop.f32.mrf.mxu0
        %v1947 = vadd.f32 %v1934, %v1946
        %v1948 = vpop.f32.mrf.mxu0
        %1949 = vdwg.mxu0
        %1950 = vmatpush.bf16.msra.mxu0 %v1443
        %1951 = vmatpush.bf16.msra.mxu0 %v1435
        %1952 = vmatpush.bf16.msra.mxu0 %v1427
        %1953 = vmatpush.bf16.msra.mxu0 %v1419
        %1954 = vmatpush.bf16.msra.mxu0 %v1411
        %1955 = vmatpush.bf16.msra.mxu0 %v1403
        %1956 = vmatpush.bf16.msra.mxu0 %v1395
        %1957 = vmatpush.bf16.msra.mxu0 %v1387
        %1958 = vmatmul.bf16.gmra.mxu0 %v610
        %v1959 = vpop.f32.mrf.mxu0
        %v1960 = vadd.f32 0.0, %v1959
        %v1961 = vpop.f32.mrf.mxu0
        %1962 = vdwg.mxu0
        %1963 = vmatpush.bf16.msra.mxu0 %v1507
        %1964 = vmatpush.bf16.msra.mxu0 %v1499
        %1965 = vmatpush.bf16.msra.mxu0 %v1491
        %1966 = vmatpush.bf16.msra.mxu0 %v1483
        %1967 = vmatpush.bf16.msra.mxu0 %v1475
        %1968 = vmatpush.bf16.msra.mxu0 %v1467
        %1969 = vmatpush.bf16.msra.mxu0 %v1459
        %1970 = vmatpush.bf16.msra.mxu0 %v1451
        %1971 = vmatmul.bf16.gmra.mxu0 %v611
        %v1972 = vpop.f32.mrf.mxu0
        %v1973 = vadd.f32 %v1960, %v1972
        %v1974 = vpop.f32.mrf.mxu0
        %1975 = vdwg.mxu0
        %1976 = vmatpush.bf16.msra.mxu0 %v1571
        %1977 = vmatpush.bf16.msra.mxu0 %v1563
        %1978 = vmatpush.bf16.msra.mxu0 %v1555
        %1979 = vmatpush.bf16.msra.mxu0 %v1547
        %1980 = vmatpush.bf16.msra.mxu0 %v1539
        %1981 = vmatpush.bf16.msra.mxu0 %v1531
        %1982 = vmatpush.bf16.msra.mxu0 %v1523
        %1983 = vmatpush.bf16.msra.mxu0 %v1515
        %1984 = vmatmul.bf16.gmra.mxu0 %v612
        %v1985 = vpop.f32.mrf.mxu0
        %v1986 = vadd.f32 %v1973, %v1985
        %v1987 = vpop.f32.mrf.mxu0
        %1988 = vdwg.mxu0
        %1989 = vmatpush.bf16.msra.mxu0 %v1635
        %1990 = vmatpush.bf16.msra.mxu0 %v1627
        %1991 = vmatpush.bf16.msra.mxu0 %v1619
        %1992 = vmatpush.bf16.msra.mxu0 %v1611
        %1993 = vmatpush.bf16.msra.mxu0 %v1603
        %1994 = vmatpush.bf16.msra.mxu0 %v1595
        %1995 = vmatpush.bf16.msra.mxu0 %v1587
        %1996 = vmatpush.bf16.msra.mxu0 %v1579
        %1997 = vmatmul.bf16.gmra.mxu0 %v613
        %v1998 = vpop.f32.mrf.mxu0
        %v1999 = vadd.f32 %v1986, %v1998
        %v2000 = vpop.f32.mrf.mxu0
        %2001 = vdwg.mxu0
        %2002 = vmatpush.bf16.msra.mxu0 %v1444
        %2003 = vmatpush.bf16.msra.mxu0 %v1436
        %2004 = vmatpush.bf16.msra.mxu0 %v1428
        %2005 = vmatpush.bf16.msra.mxu0 %v1420
        %2006 = vmatpush.bf16.msra.mxu0 %v1412
        %2007 = vmatpush.bf16.msra.mxu0 %v1404
        %2008 = vmatpush.bf16.msra.mxu0 %v1396
        %2009 = vmatpush.bf16.msra.mxu0 %v1388
        %2010 = vmatmul.bf16.gmra.mxu0 %v610
        %v2011 = vpop.f32.mrf.mxu0
        %v2012 = vadd.f32 0.0, %v2011
        %v2013 = vpop.f32.mrf.mxu0
        %2014 = vdwg.mxu0
        %2015 = vmatpush.bf16.msra.mxu0 %v1508
        %2016 = vmatpush.bf16.msra.mxu0 %v1500
        %2017 = vmatpush.bf16.msra.mxu0 %v1492
        %2018 = vmatpush.bf16.msra.mxu0 %v1484
        %2019 = vmatpush.bf16.msra.mxu0 %v1476
        %2020 = vmatpush.bf16.msra.mxu0 %v1468
        %2021 = vmatpush.bf16.msra.mxu0 %v1460
        %2022 = vmatpush.bf16.msra.mxu0 %v1452
        %2023 = vmatmul.bf16.gmra.mxu0 %v611
        %v2024 = vpop.f32.mrf.mxu0
        %v2025 = vadd.f32 %v2012, %v2024
        %v2026 = vpop.f32.mrf.mxu0
        %2027 = vdwg.mxu0
        %2028 = vmatpush.bf16.msra.mxu0 %v1572
        %2029 = vmatpush.bf16.msra.mxu0 %v1564
        %2030 = vmatpush.bf16.msra.mxu0 %v1556
        %2031 = vmatpush.bf16.msra.mxu0 %v1548
        %2032 = vmatpush.bf16.msra.mxu0 %v1540
        %2033 = vmatpush.bf16.msra.mxu0 %v1532
        %2034 = vmatpush.bf16.msra.mxu0 %v1524
        %2035 = vmatpush.bf16.msra.mxu0 %v1516
        %2036 = vmatmul.bf16.gmra.mxu0 %v612
        %v2037 = vpop.f32.mrf.mxu0
        %v2038 = vadd.f32 %v2025, %v2037
        %v2039 = vpop.f32.mrf.mxu0
        %2040 = vdwg.mxu0
        %2041 = vmatpush.bf16.msra.mxu0 %v1636
        %2042 = vmatpush.bf16.msra.mxu0 %v1628
        %2043 = vmatpush.bf16.msra.mxu0 %v1620
        %2044 = vmatpush.bf16.msra.mxu0 %v1612
        %2045 = vmatpush.bf16.msra.mxu0 %v1604
        %2046 = vmatpush.bf16.msra.mxu0 %v1596
        %2047 = vmatpush.bf16.msra.mxu0 %v1588
        %2048 = vmatpush.bf16.msra.mxu0 %v1580
        %2049 = vmatmul.bf16.gmra.mxu0 %v613
        %v2050 = vpop.f32.mrf.mxu0
        %v2051 = vadd.f32 %v2038, %v2050
        %v2052 = vpop.f32.mrf.mxu0
        %2053 = vdwg.mxu0
        %2054 = vmatpush.bf16.msra.mxu0 %v1445
        %2055 = vmatpush.bf16.msra.mxu0 %v1437
        %2056 = vmatpush.bf16.msra.mxu0 %v1429
        %2057 = vmatpush.bf16.msra.mxu0 %v1421
        %2058 = vmatpush.bf16.msra.mxu0 %v1413
        %2059 = vmatpush.bf16.msra.mxu0 %v1405
        %2060 = vmatpush.bf16.msra.mxu0 %v1397
        %2061 = vmatpush.bf16.msra.mxu0 %v1389
        %2062 = vmatmul.bf16.gmra.mxu0 %v610
        %v2063 = vpop.f32.mrf.mxu0
        %v2064 = vadd.f32 0.0, %v2063
        %v2065 = vpop.f32.mrf.mxu0
        %2066 = vdwg.mxu0
        %2067 = vmatpush.bf16.msra.mxu0 %v1509
        %2068 = vmatpush.bf16.msra.mxu0 %v1501
        %2069 = vmatpush.bf16.msra.mxu0 %v1493
        %2070 = vmatpush.bf16.msra.mxu0 %v1485
        %2071 = vmatpush.bf16.msra.mxu0 %v1477
        %2072 = vmatpush.bf16.msra.mxu0 %v1469
        %2073 = vmatpush.bf16.msra.mxu0 %v1461
        %2074 = vmatpush.bf16.msra.mxu0 %v1453
        %2075 = vmatmul.bf16.gmra.mxu0 %v611
        %v2076 = vpop.f32.mrf.mxu0
        %v2077 = vadd.f32 %v2064, %v2076
        %v2078 = vpop.f32.mrf.mxu0
        %2079 = vdwg.mxu0
        %2080 = vmatpush.bf16.msra.mxu0 %v1573
        %2081 = vmatpush.bf16.msra.mxu0 %v1565
        %2082 = vmatpush.bf16.msra.mxu0 %v1557
        %2083 = vmatpush.bf16.msra.mxu0 %v1549
        %2084 = vmatpush.bf16.msra.mxu0 %v1541
        %2085 = vmatpush.bf16.msra.mxu0 %v1533
        %2086 = vmatpush.bf16.msra.mxu0 %v1525
        %2087 = vmatpush.bf16.msra.mxu0 %v1517
        %2088 = vmatmul.bf16.gmra.mxu0 %v612
        %v2089 = vpop.f32.mrf.mxu0
        %v2090 = vadd.f32 %v2077, %v2089
        %v2091 = vpop.f32.mrf.mxu0
        %2092 = vdwg.mxu0
        %2093 = vmatpush.bf16.msra.mxu0 %v1637
        %2094 = vmatpush.bf16.msra.mxu0 %v1629
        %2095 = vmatpush.bf16.msra.mxu0 %v1621
        %2096 = vmatpush.bf16.msra.mxu0 %v1613
        %2097 = vmatpush.bf16.msra.mxu0 %v1605
        %2098 = vmatpush.bf16.msra.mxu0 %v1597
        %2099 = vmatpush.bf16.msra.mxu0 %v1589
        %2100 = vmatpush.bf16.msra.mxu0 %v1581
        %2101 = vmatmul.bf16.gmra.mxu0 %v613
        %v2102 = vpop.f32.mrf.mxu0
        %v2103 = vadd.f32 %v2090, %v2102
        %v2104 = vpop.f32.mrf.mxu0
        %2105 = vdwg.mxu0
        %2106 = vmatpush.bf16.msra.mxu0 %v1446
        %2107 = vmatpush.bf16.msra.mxu0 %v1438
        %2108 = vmatpush.bf16.msra.mxu0 %v1430
        %2109 = vmatpush.bf16.msra.mxu0 %v1422
        %2110 = vmatpush.bf16.msra.mxu0 %v1414
        %2111 = vmatpush.bf16.msra.mxu0 %v1406
        %2112 = vmatpush.bf16.msra.mxu0 %v1398
        %2113 = vmatpush.bf16.msra.mxu0 %v1390
        %2114 = vmatmul.bf16.gmra.mxu0 %v610
        %v2115 = vpop.f32.mrf.mxu0
        %v2116 = vadd.f32 0.0, %v2115
        %v2117 = vpop.f32.mrf.mxu0
        %2118 = vdwg.mxu0
        %2119 = vmatpush.bf16.msra.mxu0 %v1510
        %2120 = vmatpush.bf16.msra.mxu0 %v1502
        %2121 = vmatpush.bf16.msra.mxu0 %v1494
        %2122 = vmatpush.bf16.msra.mxu0 %v1486
        %2123 = vmatpush.bf16.msra.mxu0 %v1478
        %2124 = vmatpush.bf16.msra.mxu0 %v1470
        %2125 = vmatpush.bf16.msra.mxu0 %v1462
        %2126 = vmatpush.bf16.msra.mxu0 %v1454
        %2127 = vmatmul.bf16.gmra.mxu0 %v611
        %v2128 = vpop.f32.mrf.mxu0
        %v2129 = vadd.f32 %v2116, %v2128
        %v2130 = vpop.f32.mrf.mxu0
        %2131 = vdwg.mxu0
        %2132 = vmatpush.bf16.msra.mxu0 %v1574
        %2133 = vmatpush.bf16.msra.mxu0 %v1566
        %2134 = vmatpush.bf16.msra.mxu0 %v1558
        %2135 = vmatpush.bf16.msra.mxu0 %v1550
        %2136 = vmatpush.bf16.msra.mxu0 %v1542
        %2137 = vmatpush.bf16.msra.mxu0 %v1534
        %2138 = vmatpush.bf16.msra.mxu0 %v1526
        %2139 = vmatpush.bf16.msra.mxu0 %v1518
        %2140 = vmatmul.bf16.gmra.mxu0 %v612
        %v2141 = vpop.f32.mrf.mxu0
        %v2142 = vadd.f32 %v2129, %v2141
        %v2143 = vpop.f32.mrf.mxu0
        %2144 = vdwg.mxu0
        %2145 = vmatpush.bf16.msra.mxu0 %v1638
        %2146 = vmatpush.bf16.msra.mxu0 %v1630
        %2147 = vmatpush.bf16.msra.mxu0 %v1622
        %2148 = vmatpush.bf16.msra.mxu0 %v1614
        %2149 = vmatpush.bf16.msra.mxu0 %v1606
        %2150 = vmatpush.bf16.msra.mxu0 %v1598
        %2151 = vmatpush.bf16.msra.mxu0 %v1590
        %2152 = vmatpush.bf16.msra.mxu0 %v1582
        %2153 = vmatmul.bf16.gmra.mxu0 %v613
        %v2154 = vpop.f32.mrf.mxu0
        %v2155 = vadd.f32 %v2142, %v2154
        %v2156 = vpop.f32.mrf.mxu0
        %2157 = vdwg.mxu0
        %2158 = vmatpush.bf16.msra.mxu0 %v1447
        %2159 = vmatpush.bf16.msra.mxu0 %v1439
        %2160 = vmatpush.bf16.msra.mxu0 %v1431
        %2161 = vmatpush.bf16.msra.mxu0 %v1423
        %2162 = vmatpush.bf16.msra.mxu0 %v1415
        %2163 = vmatpush.bf16.msra.mxu0 %v1407
        %2164 = vmatpush.bf16.msra.mxu0 %v1399
        %2165 = vmatpush.bf16.msra.mxu0 %v1391
        %2166 = vmatmul.bf16.gmra.mxu0 %v610
        %v2167 = vpop.f32.mrf.mxu0
        %v2168 = vadd.f32 0.0, %v2167
        %v2169 = vpop.f32.mrf.mxu0
        %2170 = vdwg.mxu0
        %2171 = vmatpush.bf16.msra.mxu0 %v1511
        %2172 = vmatpush.bf16.msra.mxu0 %v1503
        %2173 = vmatpush.bf16.msra.mxu0 %v1495
        %2174 = vmatpush.bf16.msra.mxu0 %v1487
        %2175 = vmatpush.bf16.msra.mxu0 %v1479
        %2176 = vmatpush.bf16.msra.mxu0 %v1471
        %2177 = vmatpush.bf16.msra.mxu0 %v1463
        %2178 = vmatpush.bf16.msra.mxu0 %v1455
        %2179 = vmatmul.bf16.gmra.mxu0 %v611
        %v2180 = vpop.f32.mrf.mxu0
        %v2181 = vadd.f32 %v2168, %v2180
        %v2182 = vpop.f32.mrf.mxu0
        %2183 = vdwg.mxu0
        %2184 = vmatpush.bf16.msra.mxu0 %v1575
        %2185 = vmatpush.bf16.msra.mxu0 %v1567
        %2186 = vmatpush.bf16.msra.mxu0 %v1559
        %2187 = vmatpush.bf16.msra.mxu0 %v1551
        %2188 = vmatpush.bf16.msra.mxu0 %v1543
        %2189 = vmatpush.bf16.msra.mxu0 %v1535
        %2190 = vmatpush.bf16.msra.mxu0 %v1527
        %2191 = vmatpush.bf16.msra.mxu0 %v1519
        %2192 = vmatmul.bf16.gmra.mxu0 %v612
        %v2193 = vpop.f32.mrf.mxu0
        %v2194 = vadd.f32 %v2181, %v2193
        %v2195 = vpop.f32.mrf.mxu0
        %2196 = vdwg.mxu0
        %2197 = vmatpush.bf16.msra.mxu0 %v1639
        %2198 = vmatpush.bf16.msra.mxu0 %v1631
        %2199 = vmatpush.bf16.msra.mxu0 %v1623
        %2200 = vmatpush.bf16.msra.mxu0 %v1615
        %2201 = vmatpush.bf16.msra.mxu0 %v1607
        %2202 = vmatpush.bf16.msra.mxu0 %v1599
        %2203 = vmatpush.bf16.msra.mxu0 %v1591
        %2204 = vmatpush.bf16.msra.mxu0 %v1583
        %2205 = vmatmul.bf16.gmra.mxu0 %v613
        %v2206 = vpop.f32.mrf.mxu0
        %v2207 = vadd.f32 %v2194, %v2206
        %v2208 = vpop.f32.mrf.mxu0
        %2209 = vdwg.mxu0
        %2210 = vmatpush.bf16.msra.mxu0 %v1448
        %2211 = vmatpush.bf16.msra.mxu0 %v1440
        %2212 = vmatpush.bf16.msra.mxu0 %v1432
        %2213 = vmatpush.bf16.msra.mxu0 %v1424
        %2214 = vmatpush.bf16.msra.mxu0 %v1416
        %2215 = vmatpush.bf16.msra.mxu0 %v1408
        %2216 = vmatpush.bf16.msra.mxu0 %v1400
        %2217 = vmatpush.bf16.msra.mxu0 %v1392
        %2218 = vmatmul.bf16.gmra.mxu0 %v610
        %v2219 = vpop.f32.mrf.mxu0
        %v2220 = vadd.f32 0.0, %v2219
        %v2221 = vpop.f32.mrf.mxu0
        %2222 = vdwg.mxu0
        %2223 = vmatpush.bf16.msra.mxu0 %v1512
        %2224 = vmatpush.bf16.msra.mxu0 %v1504
        %2225 = vmatpush.bf16.msra.mxu0 %v1496
        %2226 = vmatpush.bf16.msra.mxu0 %v1488
        %2227 = vmatpush.bf16.msra.mxu0 %v1480
        %2228 = vmatpush.bf16.msra.mxu0 %v1472
        %2229 = vmatpush.bf16.msra.mxu0 %v1464
        %2230 = vmatpush.bf16.msra.mxu0 %v1456
        %2231 = vmatmul.bf16.gmra.mxu0 %v611
        %v2232 = vpop.f32.mrf.mxu0
        %v2233 = vadd.f32 %v2220, %v2232
        %v2234 = vpop.f32.mrf.mxu0
        %2235 = vdwg.mxu0
        %2236 = vmatpush.bf16.msra.mxu0 %v1576
        %2237 = vmatpush.bf16.msra.mxu0 %v1568
        %2238 = vmatpush.bf16.msra.mxu0 %v1560
        %2239 = vmatpush.bf16.msra.mxu0 %v1552
        %2240 = vmatpush.bf16.msra.mxu0 %v1544
        %2241 = vmatpush.bf16.msra.mxu0 %v1536
        %2242 = vmatpush.bf16.msra.mxu0 %v1528
        %2243 = vmatpush.bf16.msra.mxu0 %v1520
        %2244 = vmatmul.bf16.gmra.mxu0 %v612
        %v2245 = vpop.f32.mrf.mxu0
        %v2246 = vadd.f32 %v2233, %v2245
        %v2247 = vpop.f32.mrf.mxu0
        %2248 = vdwg.mxu0
        %2249 = vmatpush.bf16.msra.mxu0 %v1640
        %2250 = vmatpush.bf16.msra.mxu0 %v1632
        %2251 = vmatpush.bf16.msra.mxu0 %v1624
        %2252 = vmatpush.bf16.msra.mxu0 %v1616
        %2253 = vmatpush.bf16.msra.mxu0 %v1608
        %2254 = vmatpush.bf16.msra.mxu0 %v1600
        %2255 = vmatpush.bf16.msra.mxu0 %v1592
        %2256 = vmatpush.bf16.msra.mxu0 %v1584
        %2257 = vmatmul.bf16.gmra.mxu0 %v613
        %v2258 = vpop.f32.mrf.mxu0
        %v2259 = vadd.f32 %v2246, %v2258
        %v2260 = vpop.f32.mrf.mxu0
        %2261 = vdwg.mxu0
        %2262 = vmatpush.bf16.msra.mxu0 %v1449
        %2263 = vmatpush.bf16.msra.mxu0 %v1441
        %2264 = vmatpush.bf16.msra.mxu0 %v1433
        %2265 = vmatpush.bf16.msra.mxu0 %v1425
        %2266 = vmatpush.bf16.msra.mxu0 %v1417
        %2267 = vmatpush.bf16.msra.mxu0 %v1409
        %2268 = vmatpush.bf16.msra.mxu0 %v1401
        %2269 = vmatpush.bf16.msra.mxu0 %v1393
        %2270 = vmatmul.bf16.gmra.mxu0 %v610
        %v2271 = vpop.f32.mrf.mxu0
        %v2272 = vadd.f32 0.0, %v2271
        %v2273 = vpop.f32.mrf.mxu0
        %2274 = vdwg.mxu0
        %2275 = vmatpush.bf16.msra.mxu0 %v1513
        %2276 = vmatpush.bf16.msra.mxu0 %v1505
        %2277 = vmatpush.bf16.msra.mxu0 %v1497
        %2278 = vmatpush.bf16.msra.mxu0 %v1489
        %2279 = vmatpush.bf16.msra.mxu0 %v1481
        %2280 = vmatpush.bf16.msra.mxu0 %v1473
        %2281 = vmatpush.bf16.msra.mxu0 %v1465
        %2282 = vmatpush.bf16.msra.mxu0 %v1457
        %2283 = vmatmul.bf16.gmra.mxu0 %v611
        %v2284 = vpop.f32.mrf.mxu0
        %v2285 = vadd.f32 %v2272, %v2284
        %v2286 = vpop.f32.mrf.mxu0
        %2287 = vdwg.mxu0
        %2288 = vmatpush.bf16.msra.mxu0 %v1577
        %2289 = vmatpush.bf16.msra.mxu0 %v1569
        %2290 = vmatpush.bf16.msra.mxu0 %v1561
        %2291 = vmatpush.bf16.msra.mxu0 %v1553
        %2292 = vmatpush.bf16.msra.mxu0 %v1545
        %2293 = vmatpush.bf16.msra.mxu0 %v1537
        %2294 = vmatpush.bf16.msra.mxu0 %v1529
        %2295 = vmatpush.bf16.msra.mxu0 %v1521
        %2296 = vmatmul.bf16.gmra.mxu0 %v612
        %v2297 = vpop.f32.mrf.mxu0
        %v2298 = vadd.f32 %v2285, %v2297
        %v2299 = vpop.f32.mrf.mxu0
        %2300 = vdwg.mxu0
        %2301 = vmatpush.bf16.msra.mxu0 %v1641
        %2302 = vmatpush.bf16.msra.mxu0 %v1633
        %2303 = vmatpush.bf16.msra.mxu0 %v1625
        %2304 = vmatpush.bf16.msra.mxu0 %v1617
        %2305 = vmatpush.bf16.msra.mxu0 %v1609
        %2306 = vmatpush.bf16.msra.mxu0 %v1601
        %2307 = vmatpush.bf16.msra.mxu0 %v1593
        %2308 = vmatpush.bf16.msra.mxu0 %v1585
        %2309 = vmatmul.bf16.gmra.mxu0 %v613
        %v2310 = vpop.f32.mrf.mxu0
        %v2311 = vadd.f32 %v2298, %v2310
        %v2312 = vpop.f32.mrf.mxu0
        %2313 = vdwg.mxu0
        %v2314 = vadd.f32 %v338, %v1947
        %v2315 = vadd.f32 %v339, %v1999
        %v2316 = vadd.f32 %v340, %v2051
        %v2317 = vadd.f32 %v341, %v2103
        %v2318 = vadd.f32 %v342, %v2155
        %v2319 = vadd.f32 %v343, %v2207
        %v2320 = vadd.f32 %v344, %v2259
        %v2321 = vadd.f32 %v345, %v2311
        %2322 = vst [vmem:[#allocation2] sm:$0xff] %v2314
        %2323 = vst [vmem:[#allocation2 + $0x8] sm:$0xff] %v2315
        %2324 = vst [vmem:[#allocation2 + $0x10] sm:$0xff] %v2316
        %2325 = vst [vmem:[#allocation2 + $0x18] sm:$0xff] %v2317
        %2326 = vst [vmem:[#allocation2 + $0x20] sm:$0xff] %v2318
        %2327 = vst [vmem:[#allocation2 + $0x28] sm:$0xff] %v2319
        %2328 = vst [vmem:[#allocation2 + $0x30] sm:$0xff] %v2320
        %2329 = vst [vmem:[#allocation2 + $0x38] sm:$0xff] %v2321
        %p2330 = scmp.eq.s32.totalorder %s29, 1
        // Predicated region
        $region61: #{tpu_custom_call.1} parent=39 // pred_check
          %p2331 = pneg %p2330
        $region62: #{tpu_custom_call.1} parent=39 // pred_check_branch
          %2333 = sbr.rel (%p2331) target = $region64
        $region63: #{tpu_custom_call.1} parent=39 // pred_region
          %v2334 = vld [vmem:[#allocation2] sm:$0xff]
          %v2335 = vld [vmem:[#allocation2 + $0x8] sm:$0xff]
          %v2336 = vld [vmem:[#allocation2 + $0x10] sm:$0xff]
          %v2337 = vld [vmem:[#allocation2 + $0x18] sm:$0xff]
          %v2338 = vld [vmem:[#allocation2 + $0x20] sm:$0xff]
          %v2339 = vld [vmem:[#allocation2 + $0x28] sm:$0xff]
          %v2340 = vld [vmem:[#allocation2 + $0x30] sm:$0xff]
          %v2341 = vld [vmem:[#allocation2 + $0x38] sm:$0xff]
          %v2342 = vld [vmem:[#allocation8] sm:$0xff]
          %v2344 = vperm.slane %v2342, 0
          %v2345 = vperm.slane %v2342, 1
          %v2346 = vperm.slane %v2342, 2
          %v2347 = vperm.slane %v2342, 3
          %v2348 = vperm.slane %v2342, 4
          %v2349 = vperm.slane %v2342, 5
          %v2350 = vperm.slane %v2342, 6
          %v2351 = vperm.slane %v2342, 7
          %v2360 = vadd.f32 %v2334, %v2344
          %v2361 = vadd.f32 %v2335, %v2345
          %v2362 = vadd.f32 %v2336, %v2346
          %v2363 = vadd.f32 %v2337, %v2347
          %v2364 = vadd.f32 %v2338, %v2348
          %v2365 = vadd.f32 %v2339, %v2349
          %v2366 = vadd.f32 %v2340, %v2350
          %v2367 = vadd.f32 %v2341, %v2351
          %v2368 = vpack.c.bf16 %v2360, %v2360
          %v2369 = vpack.c.bf16 %v2361, %v2361
          %v2370 = vpack.c.bf16 %v2362, %v2362
          %v2371 = vpack.c.bf16 %v2363, %v2363
          %v2372 = vpack.c.bf16 %v2364, %v2364
          %v2373 = vpack.c.bf16 %v2365, %v2365
          %v2374 = vpack.c.bf16 %v2366, %v2366
          %v2375 = vpack.c.bf16 %v2367, %v2367
          %v2376 = vld [vmem:[%s3] sm:$0xf]
          %v2377 = vld [vmem:[%s3 + $0x4] sm:$0xf]
          %v2378 = vld [vmem:[%s3 + $0x8] sm:$0xf]
          %v2379 = vld [vmem:[%s3 + $0xc] sm:$0xf]
          %v2380 = vld [vmem:[%s3 + $0x10] sm:$0xf]
          %v2381 = vld [vmem:[%s3 + $0x14] sm:$0xf]
          %v2382 = vld [vmem:[%s3 + $0x18] sm:$0xf]
          %v2383 = vld [vmem:[%s3 + $0x1c] sm:$0xf]
          %v2384 = vld [vmem:[%s3 + $0x20] sm:$0xf]
          %v2385 = vld [vmem:[%s3 + $0x24] sm:$0xf]
          %v2386 = vld [vmem:[%s3 + $0x28] sm:$0xf]
          %v2387 = vld [vmem:[%s3 + $0x2c] sm:$0xf]
          %v2388 = vld [vmem:[%s3 + $0x30] sm:$0xf]
          %v2389 = vld [vmem:[%s3 + $0x34] sm:$0xf]
          %v2390 = vld [vmem:[%s3 + $0x38] sm:$0xf]
          %v2391 = vld [vmem:[%s3 + $0x3c] sm:$0xf]
          %v2392 = vld [vmem:[%s3 + $0x40] sm:$0xf]
          %v2393 = vld [vmem:[%s3 + $0x44] sm:$0xf]
          %v2394 = vld [vmem:[%s3 + $0x48] sm:$0xf]
          %v2395 = vld [vmem:[%s3 + $0x4c] sm:$0xf]
          %v2396 = vld [vmem:[%s3 + $0x50] sm:$0xf]
          %v2397 = vld [vmem:[%s3 + $0x54] sm:$0xf]
          %v2398 = vld [vmem:[%s3 + $0x58] sm:$0xf]
          %v2399 = vld [vmem:[%s3 + $0x5c] sm:$0xf]
          %v2400 = vld [vmem:[%s3 + $0x60] sm:$0xf]
          %v2401 = vld [vmem:[%s3 + $0x64] sm:$0xf]
          %v2402 = vld [vmem:[%s3 + $0x68] sm:$0xf]
          %v2403 = vld [vmem:[%s3 + $0x6c] sm:$0xf]
          %v2404 = vld [vmem:[%s3 + $0x70] sm:$0xf]
          %v2405 = vld [vmem:[%s3 + $0x74] sm:$0xf]
          %v2406 = vld [vmem:[%s3 + $0x78] sm:$0xf]
          %v2407 = vld [vmem:[%s3 + $0x7c] sm:$0xf]
          %v2408 = vld [vmem:[%s3 + $0x80] sm:$0xf]
          %v2409 = vld [vmem:[%s3 + $0x84] sm:$0xf]
          %v2410 = vld [vmem:[%s3 + $0x88] sm:$0xf]
          %v2411 = vld [vmem:[%s3 + $0x8c] sm:$0xf]
          %v2412 = vld [vmem:[%s3 + $0x90] sm:$0xf]
          %v2413 = vld [vmem:[%s3 + $0x94] sm:$0xf]
          %v2414 = vld [vmem:[%s3 + $0x98] sm:$0xf]
          %v2415 = vld [vmem:[%s3 + $0x9c] sm:$0xf]
          %v2416 = vld [vmem:[%s3 + $0xa0] sm:$0xf]
          %v2417 = vld [vmem:[%s3 + $0xa4] sm:$0xf]
          %v2418 = vld [vmem:[%s3 + $0xa8] sm:$0xf]
          %v2419 = vld [vmem:[%s3 + $0xac] sm:$0xf]
          %v2420 = vld [vmem:[%s3 + $0xb0] sm:$0xf]
          %v2421 = vld [vmem:[%s3 + $0xb4] sm:$0xf]
          %v2422 = vld [vmem:[%s3 + $0xb8] sm:$0xf]
          %v2423 = vld [vmem:[%s3 + $0xbc] sm:$0xf]
          %v2424 = vld [vmem:[%s3 + $0xc0] sm:$0xf]
          %v2425 = vld [vmem:[%s3 + $0xc4] sm:$0xf]
          %v2426 = vld [vmem:[%s3 + $0xc8] sm:$0xf]
          %v2427 = vld [vmem:[%s3 + $0xcc] sm:$0xf]
          %v2428 = vld [vmem:[%s3 + $0xd0] sm:$0xf]
          %v2429 = vld [vmem:[%s3 + $0xd4] sm:$0xf]
          %v2430 = vld [vmem:[%s3 + $0xd8] sm:$0xf]
          %v2431 = vld [vmem:[%s3 + $0xdc] sm:$0xf]
          %v2432 = vld [vmem:[%s3 + $0xe0] sm:$0xf]
          %v2433 = vld [vmem:[%s3 + $0xe4] sm:$0xf]
          %v2434 = vld [vmem:[%s3 + $0xe8] sm:$0xf]
          %v2435 = vld [vmem:[%s3 + $0xec] sm:$0xf]
          %v2436 = vld [vmem:[%s3 + $0xf0] sm:$0xf]
          %v2437 = vld [vmem:[%s3 + $0xf4] sm:$0xf]
          %v2438 = vld [vmem:[%s3 + $0xf8] sm:$0xf]
          %v2439 = vld [vmem:[%s3 + $0xfc] sm:$0xf]
          %v2440 = vld [vmem:[%s3 + $0x100] sm:$0xf]
          %v2441 = vld [vmem:[%s3 + $0x104] sm:$0xf]
          %v2442 = vld [vmem:[%s3 + $0x108] sm:$0xf]
          %v2443 = vld [vmem:[%s3 + $0x10c] sm:$0xf]
          %v2444 = vld [vmem:[%s3 + $0x110] sm:$0xf]
          %v2445 = vld [vmem:[%s3 + $0x114] sm:$0xf]
          %v2446 = vld [vmem:[%s3 + $0x118] sm:$0xf]
          %v2447 = vld [vmem:[%s3 + $0x11c] sm:$0xf]
          %v2448 = vld [vmem:[%s3 + $0x120] sm:$0xf]
          %v2449 = vld [vmem:[%s3 + $0x124] sm:$0xf]
          %v2450 = vld [vmem:[%s3 + $0x128] sm:$0xf]
          %v2451 = vld [vmem:[%s3 + $0x12c] sm:$0xf]
          %v2452 = vld [vmem:[%s3 + $0x130] sm:$0xf]
          %v2453 = vld [vmem:[%s3 + $0x134] sm:$0xf]
          %v2454 = vld [vmem:[%s3 + $0x138] sm:$0xf]
          %v2455 = vld [vmem:[%s3 + $0x13c] sm:$0xf]
          %v2456 = vld [vmem:[%s3 + $0x140] sm:$0xf]
          %v2457 = vld [vmem:[%s3 + $0x144] sm:$0xf]
          %v2458 = vld [vmem:[%s3 + $0x148] sm:$0xf]
          %v2459 = vld [vmem:[%s3 + $0x14c] sm:$0xf]
          %v2460 = vld [vmem:[%s3 + $0x150] sm:$0xf]
          %v2461 = vld [vmem:[%s3 + $0x154] sm:$0xf]
          %v2462 = vld [vmem:[%s3 + $0x158] sm:$0xf]
          %v2463 = vld [vmem:[%s3 + $0x15c] sm:$0xf]
          %v2464 = vld [vmem:[%s3 + $0x160] sm:$0xf]
          %v2465 = vld [vmem:[%s3 + $0x164] sm:$0xf]
          %v2466 = vld [vmem:[%s3 + $0x168] sm:$0xf]
          %v2467 = vld [vmem:[%s3 + $0x16c] sm:$0xf]
          %v2468 = vld [vmem:[%s3 + $0x170] sm:$0xf]
          %v2469 = vld [vmem:[%s3 + $0x174] sm:$0xf]
          %v2470 = vld [vmem:[%s3 + $0x178] sm:$0xf]
          %v2471 = vld [vmem:[%s3 + $0x17c] sm:$0xf]
          %v2472 = vld [vmem:[%s3 + $0x180] sm:$0xf]
          %v2473 = vld [vmem:[%s3 + $0x184] sm:$0xf]
          %v2474 = vld [vmem:[%s3 + $0x188] sm:$0xf]
          %v2475 = vld [vmem:[%s3 + $0x18c] sm:$0xf]
          %v2476 = vld [vmem:[%s3 + $0x190] sm:$0xf]
          %v2477 = vld [vmem:[%s3 + $0x194] sm:$0xf]
          %v2478 = vld [vmem:[%s3 + $0x198] sm:$0xf]
          %v2479 = vld [vmem:[%s3 + $0x19c] sm:$0xf]
          %v2480 = vld [vmem:[%s3 + $0x1a0] sm:$0xf]
          %v2481 = vld [vmem:[%s3 + $0x1a4] sm:$0xf]
          %v2482 = vld [vmem:[%s3 + $0x1a8] sm:$0xf]
          %v2483 = vld [vmem:[%s3 + $0x1ac] sm:$0xf]
          %v2484 = vld [vmem:[%s3 + $0x1b0] sm:$0xf]
          %v2485 = vld [vmem:[%s3 + $0x1b4] sm:$0xf]
          %v2486 = vld [vmem:[%s3 + $0x1b8] sm:$0xf]
          %v2487 = vld [vmem:[%s3 + $0x1bc] sm:$0xf]
          %v2488 = vld [vmem:[%s3 + $0x1c0] sm:$0xf]
          %v2489 = vld [vmem:[%s3 + $0x1c4] sm:$0xf]
          %v2490 = vld [vmem:[%s3 + $0x1c8] sm:$0xf]
          %v2491 = vld [vmem:[%s3 + $0x1cc] sm:$0xf]
          %v2492 = vld [vmem:[%s3 + $0x1d0] sm:$0xf]
          %v2493 = vld [vmem:[%s3 + $0x1d4] sm:$0xf]
          %v2494 = vld [vmem:[%s3 + $0x1d8] sm:$0xf]
          %v2495 = vld [vmem:[%s3 + $0x1dc] sm:$0xf]
          %v2496 = vld [vmem:[%s3 + $0x1e0] sm:$0xf]
          %v2497 = vld [vmem:[%s3 + $0x1e4] sm:$0xf]
          %v2498 = vld [vmem:[%s3 + $0x1e8] sm:$0xf]
          %v2499 = vld [vmem:[%s3 + $0x1ec] sm:$0xf]
          %v2500 = vld [vmem:[%s3 + $0x1f0] sm:$0xf]
          %v2501 = vld [vmem:[%s3 + $0x1f4] sm:$0xf]
          %v2502 = vld [vmem:[%s3 + $0x1f8] sm:$0xf]
          %v2503 = vld [vmem:[%s3 + $0x1fc] sm:$0xf]
          %v2504 = vld [vmem:[#allocation9] sm:$0x1]
          %v2506 = vperm.slane %v2504, 0
          %v2636 = vunpack.c.l.b16 %v2376
          %v2637 = vunpack.c.l.b16 %v2377
          %v2638 = vunpack.c.l.b16 %v2378
          %v2639 = vunpack.c.l.b16 %v2379
          %v2640 = vunpack.c.l.b16 %v2380
          %v2641 = vunpack.c.l.b16 %v2381
          %v2642 = vunpack.c.l.b16 %v2382
          %v2643 = vunpack.c.l.b16 %v2383
          %v2644 = vunpack.c.l.b16 %v2384
          %v2645 = vunpack.c.l.b16 %v2385
          %v2646 = vunpack.c.l.b16 %v2386
          %v2647 = vunpack.c.l.b16 %v2387
          %v2648 = vunpack.c.l.b16 %v2388
          %v2649 = vunpack.c.l.b16 %v2389
          %v2650 = vunpack.c.l.b16 %v2390
          %v2651 = vunpack.c.l.b16 %v2391
          %v2652 = vunpack.c.l.b16 %v2392
          %v2653 = vunpack.c.l.b16 %v2393
          %v2654 = vunpack.c.l.b16 %v2394
          %v2655 = vunpack.c.l.b16 %v2395
          %v2656 = vunpack.c.l.b16 %v2396
          %v2657 = vunpack.c.l.b16 %v2397
          %v2658 = vunpack.c.l.b16 %v2398
          %v2659 = vunpack.c.l.b16 %v2399
          %v2660 = vunpack.c.l.b16 %v2400
          %v2661 = vunpack.c.l.b16 %v2401
          %v2662 = vunpack.c.l.b16 %v2402
          %v2663 = vunpack.c.l.b16 %v2403
          %v2664 = vunpack.c.l.b16 %v2404
          %v2665 = vunpack.c.l.b16 %v2405
          %v2666 = vunpack.c.l.b16 %v2406
          %v2667 = vunpack.c.l.b16 %v2407
          %v2668 = vunpack.c.l.b16 %v2408
          %v2669 = vunpack.c.l.b16 %v2409
          %v2670 = vunpack.c.l.b16 %v2410
          %v2671 = vunpack.c.l.b16 %v2411
          %v2672 = vunpack.c.l.b16 %v2412
          %v2673 = vunpack.c.l.b16 %v2413
          %v2674 = vunpack.c.l.b16 %v2414
          %v2675 = vunpack.c.l.b16 %v2415
          %v2676 = vunpack.c.l.b16 %v2416
          %v2677 = vunpack.c.l.b16 %v2417
          %v2678 = vunpack.c.l.b16 %v2418
          %v2679 = vunpack.c.l.b16 %v2419
          %v2680 = vunpack.c.l.b16 %v2420
          %v2681 = vunpack.c.l.b16 %v2421
          %v2682 = vunpack.c.l.b16 %v2422
          %v2683 = vunpack.c.l.b16 %v2423
          %v2684 = vunpack.c.l.b16 %v2424
          %v2685 = vunpack.c.l.b16 %v2425
          %v2686 = vunpack.c.l.b16 %v2426
          %v2687 = vunpack.c.l.b16 %v2427
          %v2688 = vunpack.c.l.b16 %v2428
          %v2689 = vunpack.c.l.b16 %v2429
          %v2690 = vunpack.c.l.b16 %v2430
          %v2691 = vunpack.c.l.b16 %v2431
          %v2692 = vunpack.c.l.b16 %v2432
          %v2693 = vunpack.c.l.b16 %v2433
          %v2694 = vunpack.c.l.b16 %v2434
          %v2695 = vunpack.c.l.b16 %v2435
          %v2696 = vunpack.c.l.b16 %v2436
          %v2697 = vunpack.c.l.b16 %v2437
          %v2698 = vunpack.c.l.b16 %v2438
          %v2699 = vunpack.c.l.b16 %v2439
          %v2700 = vunpack.c.l.b16 %v2440
          %v2701 = vunpack.c.l.b16 %v2441
          %v2702 = vunpack.c.l.b16 %v2442
          %v2703 = vunpack.c.l.b16 %v2443
          %v2704 = vunpack.c.l.b16 %v2444
          %v2705 = vunpack.c.l.b16 %v2445
          %v2706 = vunpack.c.l.b16 %v2446
          %v2707 = vunpack.c.l.b16 %v2447
          %v2708 = vunpack.c.l.b16 %v2448
          %v2709 = vunpack.c.l.b16 %v2449
          %v2710 = vunpack.c.l.b16 %v2450
          %v2711 = vunpack.c.l.b16 %v2451
          %v2712 = vunpack.c.l.b16 %v2452
          %v2713 = vunpack.c.l.b16 %v2453
          %v2714 = vunpack.c.l.b16 %v2454
          %v2715 = vunpack.c.l.b16 %v2455
          %v2716 = vunpack.c.l.b16 %v2456
          %v2717 = vunpack.c.l.b16 %v2457
          %v2718 = vunpack.c.l.b16 %v2458
          %v2719 = vunpack.c.l.b16 %v2459
          %v2720 = vunpack.c.l.b16 %v2460
          %v2721 = vunpack.c.l.b16 %v2461
          %v2722 = vunpack.c.l.b16 %v2462
          %v2723 = vunpack.c.l.b16 %v2463
          %v2724 = vunpack.c.l.b16 %v2464
          %v2725 = vunpack.c.l.b16 %v2465
          %v2726 = vunpack.c.l.b16 %v2466
          %v2727 = vunpack.c.l.b16 %v2467
          %v2728 = vunpack.c.l.b16 %v2468
          %v2729 = vunpack.c.l.b16 %v2469
          %v2730 = vunpack.c.l.b16 %v2470
          %v2731 = vunpack.c.l.b16 %v2471
          %v2732 = vunpack.c.l.b16 %v2472
          %v2733 = vunpack.c.l.b16 %v2473
          %v2734 = vunpack.c.l.b16 %v2474
          %v2735 = vunpack.c.l.b16 %v2475
          %v2736 = vunpack.c.l.b16 %v2476
          %v2737 = vunpack.c.l.b16 %v2477
          %v2738 = vunpack.c.l.b16 %v2478
          %v2739 = vunpack.c.l.b16 %v2479
          %v2740 = vunpack.c.l.b16 %v2480
          %v2741 = vunpack.c.l.b16 %v2481
          %v2742 = vunpack.c.l.b16 %v2482
          %v2743 = vunpack.c.l.b16 %v2483
          %v2744 = vunpack.c.l.b16 %v2484
          %v2745 = vunpack.c.l.b16 %v2485
          %v2746 = vunpack.c.l.b16 %v2486
          %v2747 = vunpack.c.l.b16 %v2487
          %v2748 = vunpack.c.l.b16 %v2488
          %v2749 = vunpack.c.l.b16 %v2489
          %v2750 = vunpack.c.l.b16 %v2490
          %v2751 = vunpack.c.l.b16 %v2491
          %v2752 = vunpack.c.l.b16 %v2492
          %v2753 = vunpack.c.l.b16 %v2493
          %v2754 = vunpack.c.l.b16 %v2494
          %v2755 = vunpack.c.l.b16 %v2495
          %v2756 = vunpack.c.l.b16 %v2496
          %v2757 = vunpack.c.l.b16 %v2497
          %v2758 = vunpack.c.l.b16 %v2498
          %v2759 = vunpack.c.l.b16 %v2499
          %v2760 = vunpack.c.l.b16 %v2500
          %v2761 = vunpack.c.l.b16 %v2501
          %v2762 = vunpack.c.l.b16 %v2502
          %v2763 = vunpack.c.l.b16 %v2503
          %v2764 = vpack.c.b16 %v2637, %v2636
          %v2765 = vpack.c.b16 %v2639, %v2638
          %v2766 = vpack.c.b16 %v2641, %v2640
          %v2767 = vpack.c.b16 %v2643, %v2642
          %v2768 = vpack.c.b16 %v2645, %v2644
          %v2769 = vpack.c.b16 %v2647, %v2646
          %v2770 = vpack.c.b16 %v2649, %v2648
          %v2771 = vpack.c.b16 %v2651, %v2650
          %v2772 = vpack.c.b16 %v2653, %v2652
          %v2773 = vpack.c.b16 %v2655, %v2654
          %v2774 = vpack.c.b16 %v2657, %v2656
          %v2775 = vpack.c.b16 %v2659, %v2658
          %v2776 = vpack.c.b16 %v2661, %v2660
          %v2777 = vpack.c.b16 %v2663, %v2662
          %v2778 = vpack.c.b16 %v2665, %v2664
          %v2779 = vpack.c.b16 %v2667, %v2666
          %v2780 = vpack.c.b16 %v2669, %v2668
          %v2781 = vpack.c.b16 %v2671, %v2670
          %v2782 = vpack.c.b16 %v2673, %v2672
          %v2783 = vpack.c.b16 %v2675, %v2674
          %v2784 = vpack.c.b16 %v2677, %v2676
          %v2785 = vpack.c.b16 %v2679, %v2678
          %v2786 = vpack.c.b16 %v2681, %v2680
          %v2787 = vpack.c.b16 %v2683, %v2682
          %v2788 = vpack.c.b16 %v2685, %v2684
          %v2789 = vpack.c.b16 %v2687, %v2686
          %v2790 = vpack.c.b16 %v2689, %v2688
          %v2791 = vpack.c.b16 %v2691, %v2690
          %v2792 = vpack.c.b16 %v2693, %v2692
          %v2793 = vpack.c.b16 %v2695, %v2694
          %v2794 = vpack.c.b16 %v2697, %v2696
          %v2795 = vpack.c.b16 %v2699, %v2698
          %v2796 = vpack.c.b16 %v2701, %v2700
          %v2797 = vpack.c.b16 %v2703, %v2702
          %v2798 = vpack.c.b16 %v2705, %v2704
          %v2799 = vpack.c.b16 %v2707, %v2706
          %v2800 = vpack.c.b16 %v2709, %v2708
          %v2801 = vpack.c.b16 %v2711, %v2710
          %v2802 = vpack.c.b16 %v2713, %v2712
          %v2803 = vpack.c.b16 %v2715, %v2714
          %v2804 = vpack.c.b16 %v2717, %v2716
          %v2805 = vpack.c.b16 %v2719, %v2718
          %v2806 = vpack.c.b16 %v2721, %v2720
          %v2807 = vpack.c.b16 %v2723, %v2722
          %v2808 = vpack.c.b16 %v2725, %v2724
          %v2809 = vpack.c.b16 %v2727, %v2726
          %v2810 = vpack.c.b16 %v2729, %v2728
          %v2811 = vpack.c.b16 %v2731, %v2730
          %v2812 = vpack.c.b16 %v2733, %v2732
          %v2813 = vpack.c.b16 %v2735, %v2734
          %v2814 = vpack.c.b16 %v2737, %v2736
          %v2815 = vpack.c.b16 %v2739, %v2738
          %v2816 = vpack.c.b16 %v2741, %v2740
          %v2817 = vpack.c.b16 %v2743, %v2742
          %v2818 = vpack.c.b16 %v2745, %v2744
          %v2819 = vpack.c.b16 %v2747, %v2746
          %v2820 = vpack.c.b16 %v2749, %v2748
          %v2821 = vpack.c.b16 %v2751, %v2750
          %v2822 = vpack.c.b16 %v2753, %v2752
          %v2823 = vpack.c.b16 %v2755, %v2754
          %v2824 = vpack.c.b16 %v2757, %v2756
          %v2825 = vpack.c.b16 %v2759, %v2758
          %v2826 = vpack.c.b16 %v2761, %v2760
          %v2827 = vpack.c.b16 %v2763, %v2762
          %2892 = vmatpush.bf16.msra.mxu0 %v2771
          %2893 = vmatpush.bf16.msra.mxu0 %v2770
          %2894 = vmatpush.bf16.msra.mxu0 %v2769
          %2895 = vmatpush.bf16.msra.mxu0 %v2768
          %2896 = vmatpush.bf16.msra.mxu0 %v2767
          %2897 = vmatpush.bf16.msra.mxu0 %v2766
          %2898 = vmatpush.bf16.msra.mxu0 %v2765
          %2899 = vmatpush.bf16.msra.mxu0 %v2764
          %2900 = vmatmul.bf16.gmra.mxu0 %v2368
          %v2901 = vpop.f32.mrf.mxu0
          %v2902 = vadd.f32 %v2506, %v2901
          %v2903 = vpop.f32.mrf.mxu0
          %2904 = vdwg.mxu0
          %2905 = vmatpush.bf16.msra.mxu0 %v2779
          %2906 = vmatpush.bf16.msra.mxu0 %v2778
          %2907 = vmatpush.bf16.msra.mxu0 %v2777
          %2908 = vmatpush.bf16.msra.mxu0 %v2776
          %2909 = vmatpush.bf16.msra.mxu0 %v2775
          %2910 = vmatpush.bf16.msra.mxu0 %v2774
          %2911 = vmatpush.bf16.msra.mxu0 %v2773
          %2912 = vmatpush.bf16.msra.mxu0 %v2772
          %2913 = vmatmul.bf16.gmra.mxu0 %v2369
          %v2914 = vpop.f32.mrf.mxu0
          %v2915 = vadd.f32 %v2902, %v2914
          %v2916 = vpop.f32.mrf.mxu0
          %2917 = vdwg.mxu0
          %2918 = vmatpush.bf16.msra.mxu0 %v2787
          %2919 = vmatpush.bf16.msra.mxu0 %v2786
          %2920 = vmatpush.bf16.msra.mxu0 %v2785
          %2921 = vmatpush.bf16.msra.mxu0 %v2784
          %2922 = vmatpush.bf16.msra.mxu0 %v2783
          %2923 = vmatpush.bf16.msra.mxu0 %v2782
          %2924 = vmatpush.bf16.msra.mxu0 %v2781
          %2925 = vmatpush.bf16.msra.mxu0 %v2780
          %2926 = vmatmul.bf16.gmra.mxu0 %v2370
          %v2927 = vpop.f32.mrf.mxu0
          %v2928 = vadd.f32 %v2915, %v2927
          %v2929 = vpop.f32.mrf.mxu0
          %2930 = vdwg.mxu0
          %2931 = vmatpush.bf16.msra.mxu0 %v2795
          %2932 = vmatpush.bf16.msra.mxu0 %v2794
          %2933 = vmatpush.bf16.msra.mxu0 %v2793
          %2934 = vmatpush.bf16.msra.mxu0 %v2792
          %2935 = vmatpush.bf16.msra.mxu0 %v2791
          %2936 = vmatpush.bf16.msra.mxu0 %v2790
          %2937 = vmatpush.bf16.msra.mxu0 %v2789
          %2938 = vmatpush.bf16.msra.mxu0 %v2788
          %2939 = vmatmul.bf16.gmra.mxu0 %v2371
          %v2940 = vpop.f32.mrf.mxu0
          %v2941 = vadd.f32 %v2928, %v2940
          %v2942 = vpop.f32.mrf.mxu0
          %2943 = vdwg.mxu0
          %2944 = vmatpush.bf16.msra.mxu0 %v2803
          %2945 = vmatpush.bf16.msra.mxu0 %v2802
          %2946 = vmatpush.bf16.msra.mxu0 %v2801
          %2947 = vmatpush.bf16.msra.mxu0 %v2800
          %2948 = vmatpush.bf16.msra.mxu0 %v2799
          %2949 = vmatpush.bf16.msra.mxu0 %v2798
          %2950 = vmatpush.bf16.msra.mxu0 %v2797
          %2951 = vmatpush.bf16.msra.mxu0 %v2796
          %2952 = vmatmul.bf16.gmra.mxu0 %v2372
          %v2953 = vpop.f32.mrf.mxu0
          %v2954 = vadd.f32 %v2941, %v2953
          %v2955 = vpop.f32.mrf.mxu0
          %2956 = vdwg.mxu0
          %2957 = vmatpush.bf16.msra.mxu0 %v2811
          %2958 = vmatpush.bf16.msra.mxu0 %v2810
          %2959 = vmatpush.bf16.msra.mxu0 %v2809
          %2960 = vmatpush.bf16.msra.mxu0 %v2808
          %2961 = vmatpush.bf16.msra.mxu0 %v2807
          %2962 = vmatpush.bf16.msra.mxu0 %v2806
          %2963 = vmatpush.bf16.msra.mxu0 %v2805
          %2964 = vmatpush.bf16.msra.mxu0 %v2804
          %2965 = vmatmul.bf16.gmra.mxu0 %v2373
          %v2966 = vpop.f32.mrf.mxu0
          %v2967 = vadd.f32 %v2954, %v2966
          %v2968 = vpop.f32.mrf.mxu0
          %2969 = vdwg.mxu0
          %2970 = vmatpush.bf16.msra.mxu0 %v2819
          %2971 = vmatpush.bf16.msra.mxu0 %v2818
          %2972 = vmatpush.bf16.msra.mxu0 %v2817
          %2973 = vmatpush.bf16.msra.mxu0 %v2816
          %2974 = vmatpush.bf16.msra.mxu0 %v2815
          %2975 = vmatpush.bf16.msra.mxu0 %v2814
          %2976 = vmatpush.bf16.msra.mxu0 %v2813
          %2977 = vmatpush.bf16.msra.mxu0 %v2812
          %2978 = vmatmul.bf16.gmra.mxu0 %v2374
          %v2979 = vpop.f32.mrf.mxu0
          %v2980 = vadd.f32 %v2967, %v2979
          %v2981 = vpop.f32.mrf.mxu0
          %2982 = vdwg.mxu0
          %2983 = vmatpush.bf16.msra.mxu0 %v2827
          %2984 = vmatpush.bf16.msra.mxu0 %v2826
          %2985 = vmatpush.bf16.msra.mxu0 %v2825
          %2986 = vmatpush.bf16.msra.mxu0 %v2824
          %2987 = vmatpush.bf16.msra.mxu0 %v2823
          %2988 = vmatpush.bf16.msra.mxu0 %v2822
          %2989 = vmatpush.bf16.msra.mxu0 %v2821
          %2990 = vmatpush.bf16.msra.mxu0 %v2820
          %2991 = vmatmul.bf16.gmra.mxu0 %v2375
          %v2992 = vpop.f32.mrf.mxu0
          %v2993 = vadd.f32 %v2980, %v2992
          %v2994 = vpop.f32.mrf.mxu0
          %2995 = vdwg.mxu0
          %vm2996 = vcmask 130048
          %2997 = vst.msk [vmem:[#allocation11] sm:$0xff] %vm2996, %v2993
        $region64: #{tpu_custom_call.1} parent=39 // pred_fallthru
          _
        // Predicated region
        $region65: #{tpu_custom_call.1} parent=39 // pred_check
          %p2998 = pneg %p171
        $region66: #{tpu_custom_call.1} parent=39 // pred_check_branch
          %3000 = sbr.rel (%p2998) target = $region68
        $region67: #{tpu_custom_call.1} parent=39 // pred_region
          %3002 = vsyncadd [#allocation5], 0
          %s3003 = smul.addr %s28, 8
          %s3004 = scalar_lea.hbm %s5, %s3003
          %s3006 = sshll.u32 [#allocation11], 4
          %s3007 = int_to_ptr.vmem [resolvable:$true] %s3006
          %s3008 = sshll.u32 %s3004, 4
          %s3009 = int_to_ptr.hbm [resolvable:$true] %s3008
          %3011 = dma.vmem_to_hbm [thread:$0]  %s3007, 128, %s3009, [#allocation5]
        $region68: #{tpu_custom_call.1} parent=39 // pred_fallthru
          _
        // Predicated region
        $region69: #{tpu_custom_call.1} parent=39 // pred_check
          %p3012 = pneg %p171
        $region70: #{tpu_custom_call.1} parent=39 // pred_check_branch
          %3014 = sbr.rel (%p3012) target = $region72
        $region71: #{tpu_custom_call.1} parent=39 // pred_region
          %3016 = dma.done [#allocation5], 128
        $region72: #{tpu_custom_call.1} parent=39 // pred_fallthru
          _
      $region40: #{tpu_custom_call.1} parent=5 // pred_fallthru
        _
      %p3017 = scmp.le.s32.totalorder 2, %s19
      // Predicated region
      $region73: #{tpu_custom_call.1} parent=5 // pred_check
        %p3018 = pneg %p3017
      $region74: #{tpu_custom_call.1} parent=5 // pred_check_branch
        %3020 = sbr.rel (%p3018) target = $region76
      $region75: #{tpu_custom_call.1} parent=5 // pred_region
        %s3021 = ssub.s32 %s19, 2
      $region76: #{tpu_custom_call.1} parent=5 // pred_fallthru
        _
    $region6: #{tpu_custom_call.1} parent=1 // loop_footer
      %s23 = sadd.s32 1, %s19
    $region7: #{tpu_custom_call.1} parent=1 // loop_footer_branch
      %18 = sbr.rel target = $region3
    $region8: #{tpu_custom_call.1} parent=1 // loop_exit
      _
    %3022 = vsyncpa [#allocation4], 1
    %s3023 = scalar_lea.sflag [#allocation4], 1
    %3024 = vsyncpa %s3023, 1
    %3025 = vsyncpa [#allocation7], 1
    %s3026 = scalar_lea.sflag [#allocation7], 1
    %3027 = vsyncpa %s3026, 1
    %3028 = vsyncpa [#allocation10], 1
    %3029 = vsyncpa [#allocation5], 1
    %s3030 = scalar_lea.sflag [#allocation5], 1
    %3031 = vsyncpa %s3030, 1

</llo_original>
